<compile_context>
chip_gen: v7x
topology: tpu7x:2x2x1
jax: 0.10.0
libtpu: 0.0.40
codegen_flags: <defaults>
</compile_context>

<pallas_src>
import jax
import jax.numpy as jnp
from jax.experimental import pallas as pl
from jax.experimental.pallas import tpu as pltpu

EPS = 1e-5
LANE = 128
_GB_ROWS = 8  # sublane-aligned packing for the six [1, F] gamma/beta rows


def _round_up(n, m=LANE):
    return ((n + m - 1) // m) * m


def _pad2(a, rows, cols):
    return jnp.pad(a, ((0, rows - a.shape[0]), (0, cols - a.shape[1])))


def _bn_relu(h, gamma, beta, relu):
    """Training-mode BatchNorm1d (+ optional ReLU) on f32 [B, F] activations.

    hm = h - mean is bound once and reused for variance and normalization;
    rsqrt (EUP) * gamma is folded into a per-feature [1, F] scale so only one
    broadcast multiply hits the VPU.  Zero-padded feature columns produce
    exactly 0 (requires gamma/beta zero-padding: scale = rsqrt(eps)*0 = 0).
    Note: h.shape[0] is the true (never-padded) batch, so mean/var are exact.
    """
    inv_b = 1.0 / h.shape[0]
    mean = jnp.sum(h, axis=0, keepdims=True) * inv_b
    hm = h - mean
    var = jnp.sum(hm * hm, axis=0, keepdims=True) * inv_b
    scale = jax.lax.rsqrt(var + EPS) * gamma          # [1, F]
    y = hm * scale + beta
    if relu:
        y = jnp.maximum(y, 0.0)
    return y


def encoder_kernel(x_ref, w1_ref, w2_ref, w3_ref, gb_ref, out_ref):
    cdt = w1_ref.dtype                 # matmul compute dtype (bf16 or f32)
    hp = w1_ref.shape[1]
    lp = w3_ref.shape[1]
    gb = gb_ref[...]                   # [8, Fmax] f32: g1,be1,g2,be2,g3,be3,0,0

    # Linear 1 (bias cancelled by BN) -> BN -> ReLU
    h = jnp.dot(x_ref[...], w1_ref[...], preferred_element_type=jnp.float32)
    h = _bn_relu(h, gb[0:1, :hp], gb[1:2, :hp], relu=True)

    # Linear 2 -> BN -> ReLU
    h = jnp.dot(h.astype(cdt), w2_ref[...], preferred_element_type=jnp.float32)
    h = _bn_relu(h, gb[2:3, :hp], gb[3:4, :hp], relu=True)

    # Linear 3 -> BN (no ReLU at the end, matching the module)
    h = jnp.dot(h.astype(cdt), w3_ref[...], preferred_element_type=jnp.float32)
    out_ref[...] = _bn_relu(h, gb[4:5, :lp], gb[5:6, :lp], relu=False).astype(
        out_ref.dtype)


def prepare_params(params, use_bf16=True):
    """One-time: pad N dims to 128 lanes, cast weights, pack gamma/beta."""
    compute_dtype = jnp.bfloat16 if use_bf16 else jnp.float32
    in_size, hidden = params["w1"].shape
    latent = params["w3"].shape[1]
    hp, lp = _round_up(hidden), _round_up(latent)
    fmax = max(hp, lp)

    # Contraction (K) dims are NOT padded; only output/lane (N) dims are.
    w1p = _pad2(params["w1"], in_size, hp).astype(compute_dtype)
    w2p = _pad2(params["w2"], hp, hp).astype(compute_dtype)
    w3p = _pad2(params["w3"], hp, lp).astype(compute_dtype)

    # Pack gamma/beta into one [8, Fmax] f32 tile (1 DMA instead of 6).
    # Zero padding is a correctness invariant: padded columns then stay 0.
    gb = jnp.zeros((_GB_ROWS, fmax), jnp.float32)
    for i, r in enumerate((params["g1"], params["be1"], params["g2"],
                           params["be2"], params["g3"], params["be3"])):
        gb = gb.at[i, : r.shape[1]].set(r[0])

    return {"w1p": w1p, "w2p": w2p, "w3p": w3p, "gb": gb,
            "latent_dim": latent, "compute_dtype": compute_dtype}


def make_encoder_forward(prep):
    """Build a jitted forward closing over the prepared (constant) params."""
    w1p, w2p, w3p, gb = prep["w1p"], prep["w2p"], prep["w3p"], prep["gb"]
    latent = prep["latent_dim"]
    cdt = prep["compute_dtype"]
    csize = jnp.dtype(cdt).itemsize
    in_size, hp = w1p.shape
    lp = w3p.shape[1]

    vmem_spec = pl.BlockSpec(memory_space=pltpu.MemorySpace.VMEM)

    @jax.jit
    def forward(x):
        batch = x.shape[0]
        assert x.shape[1] == in_size, "input feature dim mismatch (no K padding)"
        xp = x.astype(cdt)                      # only per-call prep that remains

        # VMEM budget: single-buffered residency (no grid) + headroom,
        # capped at 48 MiB for v7x internal-scratch headroom.
        arg_bytes = (int(xp.size) * csize
                     + (int(w1p.size) + int(w2p.size) + int(w3p.size)) * csize
                     + int(gb.size) * 4)
        out_bytes = batch * lp * 4
        interm_bytes = 2 * batch * hp * (4 + csize)
        vmem_limit = int(min(48 << 20,
                             arg_bytes + out_bytes + interm_bytes + (8 << 20)))

        flops = 2 * batch * (in_size * hp + hp * hp + hp * lp)
        cost = pl.CostEstimate(
            flops=flops,
            transcendentals=2 * hp + lp,        # one rsqrt per BN feature
            bytes_accessed=arg_bytes + out_bytes,
        )

        out_p = pl.pallas_call(
            encoder_kernel,
            out_shape=jax.ShapeDtypeStruct((batch, lp), jnp.float32),
            in_specs=[vmem_spec] * 5,
            out_specs=vmem_spec,
            compiler_params=pltpu.CompilerParams(vmem_limit_bytes=vmem_limit),
            cost_estimate=cost,
        )(xp, w1p, w2p, w3p, gb)

        return out_p[:, :latent]

    return forward


def init_params(key, input_size, hidden_size, latent_dim):
    """Deterministic synthetic parameters (PyTorch-style init).

    Linear weights stored as [in, out] (pre-transposed vs. PyTorch [out, in]).
    Biases kept only for the reference (cancelled by training-mode BN).
    """
    ks = jax.random.split(key, 6)

    def lin(kw, kb, fan_in, fan_out):
        bound = 1.0 / jnp.sqrt(fan_in)
        w = jax.random.uniform(kw, (fan_in, fan_out), jnp.float32, -bound, bound)
        b = jax.random.uniform(kb, (1, fan_out), jnp.float32, -bound, bound)
        return w, b

    w1, b1 = lin(ks[0], ks[1], input_size, hidden_size)
    w2, b2 = lin(ks[2], ks[3], hidden_size, hidden_size)
    w3, b3 = lin(ks[4], ks[5], hidden_size, latent_dim)

    return {
        "w1": w1, "b1": b1,
        "g1": jnp.ones((1, hidden_size), jnp.float32),
        "be1": jnp.zeros((1, hidden_size), jnp.float32),
        "w2": w2, "b2": b2,
        "g2": jnp.ones((1, hidden_size), jnp.float32),
        "be2": jnp.zeros((1, hidden_size), jnp.float32),
        "w3": w3, "b3": b3,
        "g3": jnp.ones((1, latent_dim), jnp.float32),
        "be3": jnp.zeros((1, latent_dim), jnp.float32),
    }


def _bn_ref(h, gamma, beta):
    mean = jnp.mean(h, axis=0, keepdims=True)
    var = jnp.mean((h - mean) ** 2, axis=0, keepdims=True)
    return (h - mean) * jax.lax.rsqrt(var + EPS) * gamma + beta


def encoder_ref(x, p):
    """PyTorch-faithful pure-JAX reference (f32, biases included)."""
    h = x @ p["w1"] + p["b1"]
    h = jnp.maximum(_bn_ref(h, p["g1"], p["be1"]), 0.0)
    h = h @ p["w2"] + p["b2"]
    h = jnp.maximum(_bn_ref(h, p["g2"], p["be2"]), 0.0)
    h = h @ p["w3"] + p["b3"]
    return _bn_ref(h, p["g3"], p["be3"])


def encoder_ref_bf16(x, p):
    """Pure-JAX reference matching the kernel's bf16-matmul / f32-BN math."""
    def mm(a, w):
        return jnp.dot(a.astype(jnp.bfloat16), w.astype(jnp.bfloat16),
                       preferred_element_type=jnp.float32)
    h = jnp.maximum(_bn_ref(mm(x, p["w1"]), p["g1"], p["be1"]), 0.0)
    h = jnp.maximum(_bn_ref(mm(h, p["w2"]), p["g2"], p["be2"]), 0.0)
    return _bn_ref(mm(h, p["w3"]), p["g3"], p["be3"])


if __name__ == "__main__":
    # Shapes implied by the module: flattened 28x28 input, MLP encoder.
    # Batch of 128 feeds the MXU a full M tile; output feature dims get
    # lane-padded (100 -> 128, 20 -> 128) once in prepare_params; the
    # contraction dim (784) is left unpadded.
    batch = 128
    input_size = 28 * 28
    hidden_size = 100          # hparams['hidden_size']
    latent_dim = 20

    key = jax.random.PRNGKey(0)
    kx, kp = jax.random.split(key)
    x = jax.random.normal(kx, (batch, input_size), jnp.float32)
    params = init_params(kp, input_size, hidden_size, latent_dim)

    # 1) f32 path: semantics check (bias cancellation + padding) against the
    #    PyTorch-faithful reference.
    fwd_f32 = make_encoder_forward(prepare_params(params, use_bf16=False))
    out_f32 = jax.block_until_ready(fwd_f32(x))
    ref_f32 = encoder_ref(x, params)
    assert out_f32.shape == (batch, latent_dim)
    assert jnp.allclose(out_f32, ref_f32, atol=2e-3, rtol=2e-3), float(
        jnp.max(jnp.abs(out_f32 - ref_f32)))

    # 2) bf16 matmul path (default on all generations; v5e/v6e/v7x MXUs are
    #    bf16-native): check against a matching JAX reference.
    fwd_bf16 = make_encoder_forward(prepare_params(params, use_bf16=True))
    out_bf16 = jax.block_until_ready(fwd_bf16(x))
    ref_bf16 = encoder_ref_bf16(x, params)
    assert out_bf16.shape == (batch, latent_dim)
    assert jnp.allclose(out_bf16, ref_bf16, atol=3e-2, rtol=3e-2), float(
        jnp.max(jnp.abs(out_bf16 - ref_bf16)))

    print("KERNEL_OK")
</pallas_src>

<mosaic_0001>
module attributes {stable_mosaic.version = 11 : i64} {
  func.func @encoder_kernel(%arg0: memref<128x784xf32, #tpu.memory_space<vmem>>, %arg1: memref<784x128xf32, #tpu.memory_space<vmem>>, %arg2: memref<128x128xf32, #tpu.memory_space<vmem>>, %arg3: memref<128x128xf32, #tpu.memory_space<vmem>>, %arg4: memref<8x128xf32, #tpu.memory_space<vmem>>, %arg5: memref<128x128xf32, #tpu.memory_space<vmem>>) attributes {dimension_semantics = [], scalar_prefetch = 0 : i64, scratch_operands = 0 : i64, tpu.core_type = #tpu.core_type<tc>} {
    %c0 = arith.constant 0 : index
    %c0_0 = arith.constant 0 : index
    %0 = vector.load %arg4[%c0, %c0_0] : memref<8x128xf32, #tpu.memory_space<vmem>>, vector<8x128xf32>
    %c0_1 = arith.constant 0 : index
    %c0_2 = arith.constant 0 : index
    %1 = vector.load %arg0[%c0_1, %c0_2] : memref<128x784xf32, #tpu.memory_space<vmem>>, vector<128x784xf32>
    %c0_3 = arith.constant 0 : index
    %c0_4 = arith.constant 0 : index
    %2 = vector.load %arg1[%c0_3, %c0_4] : memref<784x128xf32, #tpu.memory_space<vmem>>, vector<784x128xf32>
    %cst = arith.constant dense<0.000000e+00> : vector<128x128xf32>
    %3 = tpu.matmul %1, %2, %cst {dimension_numbers = #tpu.dot_dimension_numbers<[1], [0], [0], [1], [0, 0, 1, 1], [], []>} : vector<128x784xf32>, vector<784x128xf32>, vector<128x128xf32> -> vector<128x128xf32>
    %4 = vector.extract_strided_slice %0 {offsets = [0, 0], sizes = [1, 128], strides = [1, 1]} : vector<8x128xf32> to vector<1x128xf32>
    %5 = vector.extract_strided_slice %0 {offsets = [1, 0], sizes = [1, 128], strides = [1, 1]} : vector<8x128xf32> to vector<1x128xf32>
    %cst_5 = arith.constant dense<0.000000e+00> : vector<128xf32>
    %6 = vector.multi_reduction <add>, %3, %cst_5 [0] : vector<128x128xf32> to vector<128xf32>
    %7 = vector.shape_cast %6 : vector<128xf32> to vector<1x128xf32>
    %cst_6 = arith.constant 7.812500e-03 : f32
    %8 = vector.broadcast %cst_6 : f32 to vector<1x128xf32>
    %9 = arith.mulf %7, %8 : vector<1x128xf32>
    %10 = vector.broadcast %9 : vector<1x128xf32> to vector<128x128xf32>
    %11 = arith.subf %3, %10 : vector<128x128xf32>
    %12 = arith.mulf %11, %11 : vector<128x128xf32>
    %cst_7 = arith.constant dense<0.000000e+00> : vector<128xf32>
    %13 = vector.multi_reduction <add>, %12, %cst_7 [0] : vector<128x128xf32> to vector<128xf32>
    %14 = vector.shape_cast %13 : vector<128xf32> to vector<1x128xf32>
    %cst_8 = arith.constant 7.812500e-03 : f32
    %15 = vector.broadcast %cst_8 : f32 to vector<1x128xf32>
    %16 = arith.mulf %14, %15 : vector<1x128xf32>
    %cst_9 = arith.constant 9.99999974E-6 : f32
    %17 = vector.broadcast %cst_9 : f32 to vector<1x128xf32>
    %18 = arith.addf %16, %17 : vector<1x128xf32>
    %19 = math.rsqrt %18 : vector<1x128xf32>
    %20 = arith.mulf %19, %4 : vector<1x128xf32>
    %21 = vector.broadcast %20 : vector<1x128xf32> to vector<128x128xf32>
    %22 = arith.mulf %11, %21 : vector<128x128xf32>
    %23 = vector.broadcast %5 : vector<1x128xf32> to vector<128x128xf32>
    %24 = arith.addf %22, %23 : vector<128x128xf32>
    %cst_10 = arith.constant 0.000000e+00 : f32
    %25 = vector.broadcast %cst_10 : f32 to vector<128x128xf32>
    %26 = arith.maximumf %24, %25 : vector<128x128xf32>
    %c0_11 = arith.constant 0 : index
    %c0_12 = arith.constant 0 : index
    %27 = vector.load %arg2[%c0_11, %c0_12] : memref<128x128xf32, #tpu.memory_space<vmem>>, vector<128x128xf32>
    %cst_13 = arith.constant dense<0.000000e+00> : vector<128x128xf32>
    %28 = tpu.matmul %26, %27, %cst_13 {dimension_numbers = #tpu.dot_dimension_numbers<[1], [0], [0], [1], [0, 0, 1, 1], [], []>} : vector<128x128xf32>, vector<128x128xf32>, vector<128x128xf32> -> vector<128x128xf32>
    %29 = vector.extract_strided_slice %0 {offsets = [2, 0], sizes = [1, 128], strides = [1, 1]} : vector<8x128xf32> to vector<1x128xf32>
    %30 = vector.extract_strided_slice %0 {offsets = [3, 0], sizes = [1, 128], strides = [1, 1]} : vector<8x128xf32> to vector<1x128xf32>
    %cst_14 = arith.constant dense<0.000000e+00> : vector<128xf32>
    %31 = vector.multi_reduction <add>, %28, %cst_14 [0] : vector<128x128xf32> to vector<128xf32>
    %32 = vector.shape_cast %31 : vector<128xf32> to vector<1x128xf32>
    %cst_15 = arith.constant 7.812500e-03 : f32
    %33 = vector.broadcast %cst_15 : f32 to vector<1x128xf32>
    %34 = arith.mulf %32, %33 : vector<1x128xf32>
    %35 = vector.broadcast %34 : vector<1x128xf32> to vector<128x128xf32>
    %36 = arith.subf %28, %35 : vector<128x128xf32>
    %37 = arith.mulf %36, %36 : vector<128x128xf32>
    %cst_16 = arith.constant dense<0.000000e+00> : vector<128xf32>
    %38 = vector.multi_reduction <add>, %37, %cst_16 [0] : vector<128x128xf32> to vector<128xf32>
    %39 = vector.shape_cast %38 : vector<128xf32> to vector<1x128xf32>
    %cst_17 = arith.constant 7.812500e-03 : f32
    %40 = vector.broadcast %cst_17 : f32 to vector<1x128xf32>
    %41 = arith.mulf %39, %40 : vector<1x128xf32>
    %cst_18 = arith.constant 9.99999974E-6 : f32
    %42 = vector.broadcast %cst_18 : f32 to vector<1x128xf32>
    %43 = arith.addf %41, %42 : vector<1x128xf32>
    %44 = math.rsqrt %43 : vector<1x128xf32>
    %45 = arith.mulf %44, %29 : vector<1x128xf32>
    %46 = vector.broadcast %45 : vector<1x128xf32> to vector<128x128xf32>
    %47 = arith.mulf %36, %46 : vector<128x128xf32>
    %48 = vector.broadcast %30 : vector<1x128xf32> to vector<128x128xf32>
    %49 = arith.addf %47, %48 : vector<128x128xf32>
    %cst_19 = arith.constant 0.000000e+00 : f32
    %50 = vector.broadcast %cst_19 : f32 to vector<128x128xf32>
    %51 = arith.maximumf %49, %50 : vector<128x128xf32>
    %c0_20 = arith.constant 0 : index
    %c0_21 = arith.constant 0 : index
    %52 = vector.load %arg3[%c0_20, %c0_21] : memref<128x128xf32, #tpu.memory_space<vmem>>, vector<128x128xf32>
    %cst_22 = arith.constant dense<0.000000e+00> : vector<128x128xf32>
    %53 = tpu.matmul %51, %52, %cst_22 {dimension_numbers = #tpu.dot_dimension_numbers<[1], [0], [0], [1], [0, 0, 1, 1], [], []>} : vector<128x128xf32>, vector<128x128xf32>, vector<128x128xf32> -> vector<128x128xf32>
    %54 = vector.extract_strided_slice %0 {offsets = [4, 0], sizes = [1, 128], strides = [1, 1]} : vector<8x128xf32> to vector<1x128xf32>
    %55 = vector.extract_strided_slice %0 {offsets = [5, 0], sizes = [1, 128], strides = [1, 1]} : vector<8x128xf32> to vector<1x128xf32>
    %cst_23 = arith.constant dense<0.000000e+00> : vector<128xf32>
    %56 = vector.multi_reduction <add>, %53, %cst_23 [0] : vector<128x128xf32> to vector<128xf32>
    %57 = vector.shape_cast %56 : vector<128xf32> to vector<1x128xf32>
    %cst_24 = arith.constant 7.812500e-03 : f32
    %58 = vector.broadcast %cst_24 : f32 to vector<1x128xf32>
    %59 = arith.mulf %57, %58 : vector<1x128xf32>
    %60 = vector.broadcast %59 : vector<1x128xf32> to vector<128x128xf32>
    %61 = arith.subf %53, %60 : vector<128x128xf32>
    %62 = arith.mulf %61, %61 : vector<128x128xf32>
    %cst_25 = arith.constant dense<0.000000e+00> : vector<128xf32>
    %63 = vector.multi_reduction <add>, %62, %cst_25 [0] : vector<128x128xf32> to vector<128xf32>
    %64 = vector.shape_cast %63 : vector<128xf32> to vector<1x128xf32>
    %cst_26 = arith.constant 7.812500e-03 : f32
    %65 = vector.broadcast %cst_26 : f32 to vector<1x128xf32>
    %66 = arith.mulf %64, %65 : vector<1x128xf32>
    %cst_27 = arith.constant 9.99999974E-6 : f32
    %67 = vector.broadcast %cst_27 : f32 to vector<1x128xf32>
    %68 = arith.addf %66, %67 : vector<1x128xf32>
    %69 = math.rsqrt %68 : vector<1x128xf32>
    %70 = arith.mulf %69, %54 : vector<1x128xf32>
    %71 = vector.broadcast %70 : vector<1x128xf32> to vector<128x128xf32>
    %72 = arith.mulf %61, %71 : vector<128x128xf32>
    %73 = vector.broadcast %55 : vector<1x128xf32> to vector<128x128xf32>
    %74 = arith.addf %72, %73 : vector<128x128xf32>
    %c0_28 = arith.constant 0 : index
    %c0_29 = arith.constant 0 : index
    %75 = vector.load %arg5[%c0_28, %c0_29] : memref<128x128xf32, #tpu.memory_space<vmem>>, vector<128x128xf32>
    tpu.vector_store %arg5[%c0_28, %c0_29], %74 {strides = array<i32>} : memref<128x128xf32, #tpu.memory_space<vmem>>, vector<128x128xf32>,
    return
  }
}

</mosaic_0001>

<llo_original>
// kernel: forward.1
$region0: #{forward.1}
  #allocation0 [shape = 'u32[]', space=smem, size = 0x4, offset = 0x4, fixed_abs, tag = 'smem constant byte address 0x4 - core index']
  #allocation1 [shape = 'u32[144,128]{1,0:T(1,128)}', space=vmem, size = 0x12000, scoped, tag = 'internal scratch']
  %s0 = inlined_call_operand.vmem [shape: f32[128,784], index: 0, kind: input, shape index: {}]
  %s1 = inlined_call_operand.vmem [shape: f32[784,128], index: 1, kind: input, shape index: {}]
  %s2 = inlined_call_operand.vmem [shape: f32[128,128], index: 2, kind: input, shape index: {}]
  %s3 = inlined_call_operand.vmem [shape: f32[128,128], index: 3, kind: input, shape index: {}]
  %s4 = inlined_call_operand.vmem [shape: f32[8,128], index: 4, kind: input, shape index: {}]
  %s5 = inlined_call_operand.vmem [shape: f32[128,128], index: 5, kind: output, shape index: {}]
  %s6 = sld [smem:[#allocation0]]
  $region30: #{forward.1} parent=0
    _
  %s8 = ssub.s32 1, %s6
  %s9 = scalar_select 0, %s8, %s6
  // Predicated region
  $region2: #{forward.1} parent=0 // pred_check
    _
  $region3: #{forward.1} parent=0 // pred_check_branch
    %11 = sbr.rel (0) target = $region5
  $region4: #{forward.1} parent=0 // pred_region
    _
  $region5: #{forward.1} parent=0 // pred_fallthru
    _
  // Predicated region
  $region6: #{forward.1} parent=0 // pred_check
    _
  $region7: #{forward.1} parent=0 // pred_check_branch
    %13 = sbr.rel (0) target = $region9
  $region8: #{forward.1} parent=0 // pred_region
    _
  $region9: #{forward.1} parent=0 // pred_fallthru
    _
  // Predicated region
  $region10: #{forward.1} parent=0 // pred_check
    _
  $region11: #{forward.1} parent=0 // pred_check_branch
    %15 = sbr.rel (0) target = $region13
  $region12: #{forward.1} parent=0 // pred_region
    _
  $region13: #{forward.1} parent=0 // pred_fallthru
    _
  // Predicated region
  $region14: #{forward.1} parent=0 // pred_check
    _
  $region15: #{forward.1} parent=0 // pred_check_branch
    %17 = sbr.rel (0) target = $region17
  $region16: #{forward.1} parent=0 // pred_region
    _
  $region17: #{forward.1} parent=0 // pred_fallthru
    _
  // Predicated region
  $region18: #{forward.1} parent=0 // pred_check
    _
  $region19: #{forward.1} parent=0 // pred_check_branch
    %19 = sbr.rel (0) target = $region21
  $region20: #{forward.1} parent=0 // pred_region
    _
  $region21: #{forward.1} parent=0 // pred_fallthru
    _
  %v20 = vld [vmem:[%s4] sm:$0xff]
  %v21 = vld [vmem:[%s0] sm:$0xff]
  %v22 = vld [vmem:[%s0 + $0x8] sm:$0xff]
  %v23 = vld [vmem:[%s0 + $0x10] sm:$0xff]
  %v24 = vld [vmem:[%s0 + $0x18] sm:$0xff]
  %v25 = vld [vmem:[%s0 + $0x20] sm:$0xff]
  %v26 = vld [vmem:[%s0 + $0x28] sm:$0xff]
  %v27 = vld [vmem:[%s0 + $0x30] sm:$0xff]
  %v28 = vld [vmem:[%s0 + $0x38] sm:$0xff]
  %v29 = vld [vmem:[%s0 + $0x40] sm:$0xff]
  %v30 = vld [vmem:[%s0 + $0x48] sm:$0xff]
  %v31 = vld [vmem:[%s0 + $0x50] sm:$0xff]
  %v32 = vld [vmem:[%s0 + $0x58] sm:$0xff]
  %v33 = vld [vmem:[%s0 + $0x60] sm:$0xff]
  %v34 = vld [vmem:[%s0 + $0x68] sm:$0xff]
  %v35 = vld [vmem:[%s0 + $0x70] sm:$0xff]
  %v36 = vld [vmem:[%s0 + $0x78] sm:$0xff]
  %v37 = vld [vmem:[%s0 + $0x80] sm:$0xff]
  %v38 = vld [vmem:[%s0 + $0x88] sm:$0xff]
  %v39 = vld [vmem:[%s0 + $0x90] sm:$0xff]
  %v40 = vld [vmem:[%s0 + $0x98] sm:$0xff]
  %v41 = vld [vmem:[%s0 + $0xa0] sm:$0xff]
  %v42 = vld [vmem:[%s0 + $0xa8] sm:$0xff]
  %v43 = vld [vmem:[%s0 + $0xb0] sm:$0xff]
  %v44 = vld [vmem:[%s0 + $0xb8] sm:$0xff]
  %v45 = vld [vmem:[%s0 + $0xc0] sm:$0xff]
  %v46 = vld [vmem:[%s0 + $0xc8] sm:$0xff]
  %v47 = vld [vmem:[%s0 + $0xd0] sm:$0xff]
  %v48 = vld [vmem:[%s0 + $0xd8] sm:$0xff]
  %v49 = vld [vmem:[%s0 + $0xe0] sm:$0xff]
  %v50 = vld [vmem:[%s0 + $0xe8] sm:$0xff]
  %v51 = vld [vmem:[%s0 + $0xf0] sm:$0xff]
  %v52 = vld [vmem:[%s0 + $0xf8] sm:$0xff]
  %v53 = vld [vmem:[%s0 + $0x100] sm:$0xff]
  %v54 = vld [vmem:[%s0 + $0x108] sm:$0xff]
  %v55 = vld [vmem:[%s0 + $0x110] sm:$0xff]
  %v56 = vld [vmem:[%s0 + $0x118] sm:$0xff]
  %v57 = vld [vmem:[%s0 + $0x120] sm:$0xff]
  %v58 = vld [vmem:[%s0 + $0x128] sm:$0xff]
  %v59 = vld [vmem:[%s0 + $0x130] sm:$0xff]
  %v60 = vld [vmem:[%s0 + $0x138] sm:$0xff]
  %v61 = vld [vmem:[%s0 + $0x140] sm:$0xff]
  %v62 = vld [vmem:[%s0 + $0x148] sm:$0xff]
  %v63 = vld [vmem:[%s0 + $0x150] sm:$0xff]
  %v64 = vld [vmem:[%s0 + $0x158] sm:$0xff]
  %v65 = vld [vmem:[%s0 + $0x160] sm:$0xff]
  %v66 = vld [vmem:[%s0 + $0x168] sm:$0xff]
  %v67 = vld [vmem:[%s0 + $0x170] sm:$0xff]
  %v68 = vld [vmem:[%s0 + $0x178] sm:$0xff]
  %v69 = vld [vmem:[%s0 + $0x180] sm:$0xff]
  %v70 = vld [vmem:[%s0 + $0x188] sm:$0xff]
  %v71 = vld [vmem:[%s0 + $0x190] sm:$0xff]
  %v72 = vld [vmem:[%s0 + $0x198] sm:$0xff]
  %v73 = vld [vmem:[%s0 + $0x1a0] sm:$0xff]
  %v74 = vld [vmem:[%s0 + $0x1a8] sm:$0xff]
  %v75 = vld [vmem:[%s0 + $0x1b0] sm:$0xff]
  %v76 = vld [vmem:[%s0 + $0x1b8] sm:$0xff]
  %v77 = vld [vmem:[%s0 + $0x1c0] sm:$0xff]
  %v78 = vld [vmem:[%s0 + $0x1c8] sm:$0xff]
  %v79 = vld [vmem:[%s0 + $0x1d0] sm:$0xff]
  %v80 = vld [vmem:[%s0 + $0x1d8] sm:$0xff]
  %v81 = vld [vmem:[%s0 + $0x1e0] sm:$0xff]
  %v82 = vld [vmem:[%s0 + $0x1e8] sm:$0xff]
  %v83 = vld [vmem:[%s0 + $0x1f0] sm:$0xff]
  %v84 = vld [vmem:[%s0 + $0x1f8] sm:$0xff]
  %v85 = vld [vmem:[%s0 + $0x200] sm:$0xff]
  %v86 = vld [vmem:[%s0 + $0x208] sm:$0xff]
  %v87 = vld [vmem:[%s0 + $0x210] sm:$0xff]
  %v88 = vld [vmem:[%s0 + $0x218] sm:$0xff]
  %v89 = vld [vmem:[%s0 + $0x220] sm:$0xff]
  %v90 = vld [vmem:[%s0 + $0x228] sm:$0xff]
  %v91 = vld [vmem:[%s0 + $0x230] sm:$0xff]
  %v92 = vld [vmem:[%s0 + $0x238] sm:$0xff]
  %v93 = vld [vmem:[%s0 + $0x240] sm:$0xff]
  %v94 = vld [vmem:[%s0 + $0x248] sm:$0xff]
  %v95 = vld [vmem:[%s0 + $0x250] sm:$0xff]
  %v96 = vld [vmem:[%s0 + $0x258] sm:$0xff]
  %v97 = vld [vmem:[%s0 + $0x260] sm:$0xff]
  %v98 = vld [vmem:[%s0 + $0x268] sm:$0xff]
  %v99 = vld [vmem:[%s0 + $0x270] sm:$0xff]
  %v100 = vld [vmem:[%s0 + $0x278] sm:$0xff]
  %v101 = vld [vmem:[%s0 + $0x280] sm:$0xff]
  %v102 = vld [vmem:[%s0 + $0x288] sm:$0xff]
  %v103 = vld [vmem:[%s0 + $0x290] sm:$0xff]
  %v104 = vld [vmem:[%s0 + $0x298] sm:$0xff]
  %v105 = vld [vmem:[%s0 + $0x2a0] sm:$0xff]
  %v106 = vld [vmem:[%s0 + $0x2a8] sm:$0xff]
  %v107 = vld [vmem:[%s0 + $0x2b0] sm:$0xff]
  %v108 = vld [vmem:[%s0 + $0x2b8] sm:$0xff]
  %v109 = vld [vmem:[%s0 + $0x2c0] sm:$0xff]
  %v110 = vld [vmem:[%s0 + $0x2c8] sm:$0xff]
  %v111 = vld [vmem:[%s0 + $0x2d0] sm:$0xff]
  %v112 = vld [vmem:[%s0 + $0x2d8] sm:$0xff]
  %v113 = vld [vmem:[%s0 + $0x2e0] sm:$0xff]
  %v114 = vld [vmem:[%s0 + $0x2e8] sm:$0xff]
  %v115 = vld [vmem:[%s0 + $0x2f0] sm:$0xff]
  %v116 = vld [vmem:[%s0 + $0x2f8] sm:$0xff]
  %v117 = vld [vmem:[%s0 + $0x300] sm:$0xff]
  %v118 = vld [vmem:[%s0 + $0x308] sm:$0xff]
  %v119 = vld [vmem:[%s0 + $0x310] sm:$0xff]
  %v120 = vld [vmem:[%s0 + $0x318] sm:$0xff]
  %v121 = vld [vmem:[%s0 + $0x320] sm:$0xff]
  %v122 = vld [vmem:[%s0 + $0x328] sm:$0xff]
  %v123 = vld [vmem:[%s0 + $0x330] sm:$0xff]
  %v124 = vld [vmem:[%s0 + $0x338] sm:$0xff]
  %v125 = vld [vmem:[%s0 + $0x340] sm:$0xff]
  %v126 = vld [vmem:[%s0 + $0x348] sm:$0xff]
  %v127 = vld [vmem:[%s0 + $0x350] sm:$0xff]
  %v128 = vld [vmem:[%s0 + $0x358] sm:$0xff]
  %v129 = vld [vmem:[%s0 + $0x360] sm:$0xff]
  %v130 = vld [vmem:[%s0 + $0x368] sm:$0xff]
  %v131 = vld [vmem:[%s0 + $0x370] sm:$0xff]
  %v132 = vld [vmem:[%s0 + $0x378] sm:$0xff]
  %v133 = vld [vmem:[%s1] sm:$0xff]
  %v134 = vld [vmem:[%s1 + $0x8] sm:$0xff]
  %v135 = vld [vmem:[%s1 + $0x10] sm:$0xff]
  %v136 = vld [vmem:[%s1 + $0x18] sm:$0xff]
  %v137 = vld [vmem:[%s1 + $0x20] sm:$0xff]
  %v138 = vld [vmem:[%s1 + $0x28] sm:$0xff]
  %v139 = vld [vmem:[%s1 + $0x30] sm:$0xff]
  %v140 = vld [vmem:[%s1 + $0x38] sm:$0xff]
  %v141 = vld [vmem:[%s1 + $0x40] sm:$0xff]
  %v142 = vld [vmem:[%s1 + $0x48] sm:$0xff]
  %v143 = vld [vmem:[%s1 + $0x50] sm:$0xff]
  %v144 = vld [vmem:[%s1 + $0x58] sm:$0xff]
  %v145 = vld [vmem:[%s1 + $0x60] sm:$0xff]
  %v146 = vld [vmem:[%s1 + $0x68] sm:$0xff]
  %v147 = vld [vmem:[%s1 + $0x70] sm:$0xff]
  %v148 = vld [vmem:[%s1 + $0x78] sm:$0xff]
  %v149 = vld [vmem:[%s1 + $0x80] sm:$0xff]
  %v150 = vld [vmem:[%s1 + $0x88] sm:$0xff]
  %v151 = vld [vmem:[%s1 + $0x90] sm:$0xff]
  %v152 = vld [vmem:[%s1 + $0x98] sm:$0xff]
  %v153 = vld [vmem:[%s1 + $0xa0] sm:$0xff]
  %v154 = vld [vmem:[%s1 + $0xa8] sm:$0xff]
  %v155 = vld [vmem:[%s1 + $0xb0] sm:$0xff]
  %v156 = vld [vmem:[%s1 + $0xb8] sm:$0xff]
  %v157 = vld [vmem:[%s1 + $0xc0] sm:$0xff]
  %v158 = vld [vmem:[%s1 + $0xc8] sm:$0xff]
  %v159 = vld [vmem:[%s1 + $0xd0] sm:$0xff]
  %v160 = vld [vmem:[%s1 + $0xd8] sm:$0xff]
  %v161 = vld [vmem:[%s1 + $0xe0] sm:$0xff]
  %v162 = vld [vmem:[%s1 + $0xe8] sm:$0xff]
  %v163 = vld [vmem:[%s1 + $0xf0] sm:$0xff]
  %v164 = vld [vmem:[%s1 + $0xf8] sm:$0xff]
  %v165 = vld [vmem:[%s1 + $0x100] sm:$0xff]
  %v166 = vld [vmem:[%s1 + $0x108] sm:$0xff]
  %v167 = vld [vmem:[%s1 + $0x110] sm:$0xff]
  %v168 = vld [vmem:[%s1 + $0x118] sm:$0xff]
  %v169 = vld [vmem:[%s1 + $0x120] sm:$0xff]
  %v170 = vld [vmem:[%s1 + $0x128] sm:$0xff]
  %v171 = vld [vmem:[%s1 + $0x130] sm:$0xff]
  %v172 = vld [vmem:[%s1 + $0x138] sm:$0xff]
  %v173 = vld [vmem:[%s1 + $0x140] sm:$0xff]
  %v174 = vld [vmem:[%s1 + $0x148] sm:$0xff]
  %v175 = vld [vmem:[%s1 + $0x150] sm:$0xff]
  %v176 = vld [vmem:[%s1 + $0x158] sm:$0xff]
  %v177 = vld [vmem:[%s1 + $0x160] sm:$0xff]
  %v178 = vld [vmem:[%s1 + $0x168] sm:$0xff]
  %v179 = vld [vmem:[%s1 + $0x170] sm:$0xff]
  %v180 = vld [vmem:[%s1 + $0x178] sm:$0xff]
  %v181 = vld [vmem:[%s1 + $0x180] sm:$0xff]
  %v182 = vld [vmem:[%s1 + $0x188] sm:$0xff]
  %v183 = vld [vmem:[%s1 + $0x190] sm:$0xff]
  %v184 = vld [vmem:[%s1 + $0x198] sm:$0xff]
  %v185 = vld [vmem:[%s1 + $0x1a0] sm:$0xff]
  %v186 = vld [vmem:[%s1 + $0x1a8] sm:$0xff]
  %v187 = vld [vmem:[%s1 + $0x1b0] sm:$0xff]
  %v188 = vld [vmem:[%s1 + $0x1b8] sm:$0xff]
  %v189 = vld [vmem:[%s1 + $0x1c0] sm:$0xff]
  %v190 = vld [vmem:[%s1 + $0x1c8] sm:$0xff]
  %v191 = vld [vmem:[%s1 + $0x1d0] sm:$0xff]
  %v192 = vld [vmem:[%s1 + $0x1d8] sm:$0xff]
  %v193 = vld [vmem:[%s1 + $0x1e0] sm:$0xff]
  %v194 = vld [vmem:[%s1 + $0x1e8] sm:$0xff]
  %v195 = vld [vmem:[%s1 + $0x1f0] sm:$0xff]
  %v196 = vld [vmem:[%s1 + $0x1f8] sm:$0xff]
  %v197 = vld [vmem:[%s1 + $0x200] sm:$0xff]
  %v198 = vld [vmem:[%s1 + $0x208] sm:$0xff]
  %v199 = vld [vmem:[%s1 + $0x210] sm:$0xff]
  %v200 = vld [vmem:[%s1 + $0x218] sm:$0xff]
  %v201 = vld [vmem:[%s1 + $0x220] sm:$0xff]
  %v202 = vld [vmem:[%s1 + $0x228] sm:$0xff]
  %v203 = vld [vmem:[%s1 + $0x230] sm:$0xff]
  %v204 = vld [vmem:[%s1 + $0x238] sm:$0xff]
  %v205 = vld [vmem:[%s1 + $0x240] sm:$0xff]
  %v206 = vld [vmem:[%s1 + $0x248] sm:$0xff]
  %v207 = vld [vmem:[%s1 + $0x250] sm:$0xff]
  %v208 = vld [vmem:[%s1 + $0x258] sm:$0xff]
  %v209 = vld [vmem:[%s1 + $0x260] sm:$0xff]
  %v210 = vld [vmem:[%s1 + $0x268] sm:$0xff]
  %v211 = vld [vmem:[%s1 + $0x270] sm:$0xff]
  %v212 = vld [vmem:[%s1 + $0x278] sm:$0xff]
  %v213 = vld [vmem:[%s1 + $0x280] sm:$0xff]
  %v214 = vld [vmem:[%s1 + $0x288] sm:$0xff]
  %v215 = vld [vmem:[%s1 + $0x290] sm:$0xff]
  %v216 = vld [vmem:[%s1 + $0x298] sm:$0xff]
  %v217 = vld [vmem:[%s1 + $0x2a0] sm:$0xff]
  %v218 = vld [vmem:[%s1 + $0x2a8] sm:$0xff]
  %v219 = vld [vmem:[%s1 + $0x2b0] sm:$0xff]
  %v220 = vld [vmem:[%s1 + $0x2b8] sm:$0xff]
  %v221 = vld [vmem:[%s1 + $0x2c0] sm:$0xff]
  %v222 = vld [vmem:[%s1 + $0x2c8] sm:$0xff]
  %v223 = vld [vmem:[%s1 + $0x2d0] sm:$0xff]
  %v224 = vld [vmem:[%s1 + $0x2d8] sm:$0xff]
  %v225 = vld [vmem:[%s1 + $0x2e0] sm:$0xff]
  %v226 = vld [vmem:[%s1 + $0x2e8] sm:$0xff]
  %v227 = vld [vmem:[%s1 + $0x2f0] sm:$0xff]
  %v228 = vld [vmem:[%s1 + $0x2f8] sm:$0xff]
  %v229 = vld [vmem:[%s1 + $0x300] sm:$0xff]
  %v230 = vld [vmem:[%s1 + $0x308] sm:$0xff]
  %vm231 = vcmask 130048
  %v233 = vsel %vm231, %v27, 0
  %v236 = vsel %vm231, %v34, 0
  %v239 = vsel %vm231, %v41, 0
  %v242 = vsel %vm231, %v48, 0
  %v245 = vsel %vm231, %v55, 0
  %v248 = vsel %vm231, %v62, 0
  %v251 = vsel %vm231, %v69, 0
  %v254 = vsel %vm231, %v76, 0
  %v257 = vsel %vm231, %v83, 0
  %v260 = vsel %vm231, %v90, 0
  %v263 = vsel %vm231, %v97, 0
  %v266 = vsel %vm231, %v104, 0
  %v269 = vsel %vm231, %v111, 0
  %v272 = vsel %vm231, %v118, 0
  %v275 = vsel %vm231, %v125, 0
  %v278 = vsel %vm231, %v132, 0
  %280 = vmatprep.subr.mxu0 0.0
  %281 = vmatpush1.msra.mxu0 %v133
  %282 = vmatprep.subr.mxu0 0.0
  %283 = vmatpush1.msra.mxu0 %v134
  %284 = vmatprep.subr.mxu0 0.0
  %285 = vmatpush1.msra.mxu0 %v135
  %286 = vmatprep.subr.mxu0 0.0
  %287 = vmatpush1.msra.mxu0 %v136
  %288 = vmatprep.subr.mxu0 0.0
  %289 = vmatpush1.msra.mxu0 %v137
  %290 = vmatprep.subr.mxu0 0.0
  %291 = vmatpush1.msra.mxu0 %v138
  %292 = vmatprep.subr.mxu0 0.0
  %293 = vmatpush1.msra.mxu0 %v139
  %294 = vmatprep.subr.mxu0 0.0
  %295 = vmatpush1.msra.mxu0 %v140
  %296 = vmatprep.subr.mxu0 0.0
  %297 = vmatpush1.msra.mxu0 %v141
  %298 = vmatprep.subr.mxu0 0.0
  %299 = vmatpush1.msra.mxu0 %v142
  %300 = vmatprep.subr.mxu0 0.0
  %301 = vmatpush1.msra.mxu0 %v143
  %302 = vmatprep.subr.mxu0 0.0
  %303 = vmatpush1.msra.mxu0 %v144
  %304 = vmatprep.subr.mxu0 0.0
  %305 = vmatpush1.msra.mxu0 %v145
  %306 = vmatprep.subr.mxu0 0.0
  %307 = vmatpush1.msra.mxu0 %v146
  %308 = vmatprep.subr.mxu0 0.0
  %309 = vmatpush1.msra.mxu0 %v147
  %310 = vmatprep.subr.mxu0 0.0
  %311 = vmatpush1.msra.mxu0 %v148
  %312 = vmatprep.subr.mxu0 0.0
  %313 = vmatpush1.msra.mxu0 %v149
  %314 = vmatprep.subr.mxu0 0.0
  %315 = vmatpush1.msra.mxu0 %v150
  %316 = vmatprep.subr.mxu0 0.0
  %317 = vmatpush1.msra.mxu0 %v151
  %318 = vmatprep.subr.mxu0 0.0
  %319 = vmatpush1.msra.mxu0 %v152
  %320 = vmatprep.subr.mxu0 0.0
  %321 = vmatpush1.msra.mxu0 %v153
  %322 = vmatprep.subr.mxu0 0.0
  %323 = vmatpush1.msra.mxu0 %v154
  %324 = vmatprep.subr.mxu0 0.0
  %325 = vmatpush1.msra.mxu0 %v155
  %326 = vmatprep.subr.mxu0 0.0
  %327 = vmatpush1.msra.mxu0 %v156
  %328 = vmatprep.subr.mxu0 0.0
  %329 = vmatpush1.msra.mxu0 %v157
  %330 = vmatprep.subr.mxu0 0.0
  %331 = vmatpush1.msra.mxu0 %v158
  %332 = vmatprep.subr.mxu0 0.0
  %333 = vmatpush1.msra.mxu0 %v159
  %334 = vmatprep.subr.mxu0 0.0
  %335 = vmatpush1.msra.mxu0 %v160
  %336 = vmatprep.subr.mxu0 0.0
  %337 = vmatpush1.msra.mxu0 %v161
  %338 = vmatprep.subr.mxu0 0.0
  %339 = vmatpush1.msra.mxu0 %v162
  %340 = vmatprep.subr.mxu0 0.0
  %341 = vmatpush1.msra.mxu0 %v163
  %342 = vmatprep.subr.mxu0 0.0
  %343 = vmatpush1.msra.mxu0 %v164
  %344 = vmatprep.mubr.f32.mxu0 %v22
  %345 = vmatmul.mubr.f32.gmra.mrb[0].mxu0 %v21
  %v346 = vpop.f32.mrb[0].mxu0
  %v347 = vadd.f32 0.0, %v346
  %v348 = vpop.f32.mrb[0].mxu0
  %349 = vmatprep.mubr.f32.mxu0 %v29
  %350 = vmatmul.mubr.f32.gmra.mrb[0].mxu0 %v28
  %v351 = vpop.f32.mrb[0].mxu0
  %v352 = vadd.f32 0.0, %v351
  %v353 = vpop.f32.mrb[0].mxu0
  %354 = vmatprep.mubr.f32.mxu0 %v36
  %355 = vmatmul.mubr.f32.gmra.mrb[0].mxu0 %v35
  %v356 = vpop.f32.mrb[0].mxu0
  %v357 = vadd.f32 0.0, %v356
  %v358 = vpop.f32.mrb[0].mxu0
  %359 = vmatprep.mubr.f32.mxu0 %v43
  %360 = vmatmul.mubr.f32.gmra.mrb[0].mxu0 %v42
  %v361 = vpop.f32.mrb[0].mxu0
  %v362 = vadd.f32 0.0, %v361
  %v363 = vpop.f32.mrb[0].mxu0
  %364 = vmatprep.mubr.f32.mxu0 %v50
  %365 = vmatmul.mubr.f32.gmra.mrb[0].mxu0 %v49
  %v366 = vpop.f32.mrb[0].mxu0
  %v367 = vadd.f32 0.0, %v366
  %v368 = vpop.f32.mrb[0].mxu0
  %369 = vmatprep.mubr.f32.mxu0 %v57
  %370 = vmatmul.mubr.f32.gmra.mrb[0].mxu0 %v56
  %v371 = vpop.f32.mrb[0].mxu0
  %v372 = vadd.f32 0.0, %v371
  %v373 = vpop.f32.mrb[0].mxu0
  %374 = vmatprep.mubr.f32.mxu0 %v64
  %375 = vmatmul.mubr.f32.gmra.mrb[0].mxu0 %v63
  %v376 = vpop.f32.mrb[0].mxu0
  %v377 = vadd.f32 0.0, %v376
  %v378 = vpop.f32.mrb[0].mxu0
  %379 = vmatprep.mubr.f32.mxu0 %v71
  %380 = vmatmul.mubr.f32.gmra.mrb[0].mxu0 %v70
  %v381 = vpop.f32.mrb[0].mxu0
  %v382 = vadd.f32 0.0, %v381
  %v383 = vpop.f32.mrb[0].mxu0
  %384 = vmatprep.mubr.f32.mxu0 %v78
  %385 = vmatmul.mubr.f32.gmra.mrb[0].mxu0 %v77
  %v386 = vpop.f32.mrb[0].mxu0
  %v387 = vadd.f32 0.0, %v386
  %v388 = vpop.f32.mrb[0].mxu0
  %389 = vmatprep.mubr.f32.mxu0 %v85
  %390 = vmatmul.mubr.f32.gmra.mrb[0].mxu0 %v84
  %v391 = vpop.f32.mrb[0].mxu0
  %v392 = vadd.f32 0.0, %v391
  %v393 = vpop.f32.mrb[0].mxu0
  %394 = vmatprep.mubr.f32.mxu0 %v92
  %395 = vmatmul.mubr.f32.gmra.mrb[0].mxu0 %v91
  %v396 = vpop.f32.mrb[0].mxu0
  %v397 = vadd.f32 0.0, %v396
  %v398 = vpop.f32.mrb[0].mxu0
  %399 = vmatprep.mubr.f32.mxu0 %v99
  %400 = vmatmul.mubr.f32.gmra.mrb[0].mxu0 %v98
  %v401 = vpop.f32.mrb[0].mxu0
  %v402 = vadd.f32 0.0, %v401
  %v403 = vpop.f32.mrb[0].mxu0
  %404 = vmatprep.mubr.f32.mxu0 %v106
  %405 = vmatmul.mubr.f32.gmra.mrb[0].mxu0 %v105
  %v406 = vpop.f32.mrb[0].mxu0
  %v407 = vadd.f32 0.0, %v406
  %v408 = vpop.f32.mrb[0].mxu0
  %409 = vmatprep.mubr.f32.mxu0 %v113
  %410 = vmatmul.mubr.f32.gmra.mrb[0].mxu0 %v112
  %v411 = vpop.f32.mrb[0].mxu0
  %v412 = vadd.f32 0.0, %v411
  %v413 = vpop.f32.mrb[0].mxu0
  %414 = vmatprep.mubr.f32.mxu0 %v120
  %415 = vmatmul.mubr.f32.gmra.mrb[0].mxu0 %v119
  %v416 = vpop.f32.mrb[0].mxu0
  %v417 = vadd.f32 0.0, %v416
  %v418 = vpop.f32.mrb[0].mxu0
  %419 = vmatprep.mubr.f32.mxu0 %v127
  %420 = vmatmul.mubr.f32.gmra.mrb[0].mxu0 %v126
  %v421 = vpop.f32.mrb[0].mxu0
  %v422 = vadd.f32 0.0, %v421
  %v423 = vpop.f32.mrb[0].mxu0
  %424 = vdwg.mxu0
  %425 = vmatprep.subr.mxu0 0.0
  %426 = vmatpush1.msra.mxu0 %v165
  %427 = vmatprep.subr.mxu0 0.0
  %428 = vmatpush1.msra.mxu0 %v166
  %429 = vmatprep.subr.mxu0 0.0
  %430 = vmatpush1.msra.mxu0 %v167
  %431 = vmatprep.subr.mxu0 0.0
  %432 = vmatpush1.msra.mxu0 %v168
  %433 = vmatprep.subr.mxu0 0.0
  %434 = vmatpush1.msra.mxu0 %v169
  %435 = vmatprep.subr.mxu0 0.0
  %436 = vmatpush1.msra.mxu0 %v170
  %437 = vmatprep.subr.mxu0 0.0
  %438 = vmatpush1.msra.mxu0 %v171
  %439 = vmatprep.subr.mxu0 0.0
  %440 = vmatpush1.msra.mxu0 %v172
  %441 = vmatprep.subr.mxu0 0.0
  %442 = vmatpush1.msra.mxu0 %v173
  %443 = vmatprep.subr.mxu0 0.0
  %444 = vmatpush1.msra.mxu0 %v174
  %445 = vmatprep.subr.mxu0 0.0
  %446 = vmatpush1.msra.mxu0 %v175
  %447 = vmatprep.subr.mxu0 0.0
  %448 = vmatpush1.msra.mxu0 %v176
  %449 = vmatprep.subr.mxu0 0.0
  %450 = vmatpush1.msra.mxu0 %v177
  %451 = vmatprep.subr.mxu0 0.0
  %452 = vmatpush1.msra.mxu0 %v178
  %453 = vmatprep.subr.mxu0 0.0
  %454 = vmatpush1.msra.mxu0 %v179
  %455 = vmatprep.subr.mxu0 0.0
  %456 = vmatpush1.msra.mxu0 %v180
  %457 = vmatprep.subr.mxu0 0.0
  %458 = vmatpush1.msra.mxu0 %v181
  %459 = vmatprep.subr.mxu0 0.0
  %460 = vmatpush1.msra.mxu0 %v182
  %461 = vmatprep.subr.mxu0 0.0
  %462 = vmatpush1.msra.mxu0 %v183
  %463 = vmatprep.subr.mxu0 0.0
  %464 = vmatpush1.msra.mxu0 %v184
  %465 = vmatprep.subr.mxu0 0.0
  %466 = vmatpush1.msra.mxu0 %v185
  %467 = vmatprep.subr.mxu0 0.0
  %468 = vmatpush1.msra.mxu0 %v186
  %469 = vmatprep.subr.mxu0 0.0
  %470 = vmatpush1.msra.mxu0 %v187
  %471 = vmatprep.subr.mxu0 0.0
  %472 = vmatpush1.msra.mxu0 %v188
  %473 = vmatprep.subr.mxu0 0.0
  %474 = vmatpush1.msra.mxu0 %v189
  %475 = vmatprep.subr.mxu0 0.0
  %476 = vmatpush1.msra.mxu0 %v190
  %477 = vmatprep.subr.mxu0 0.0
  %478 = vmatpush1.msra.mxu0 %v191
  %479 = vmatprep.subr.mxu0 0.0
  %480 = vmatpush1.msra.mxu0 %v192
  %481 = vmatprep.subr.mxu0 0.0
  %482 = vmatpush1.msra.mxu0 %v193
  %483 = vmatprep.subr.mxu0 0.0
  %484 = vmatpush1.msra.mxu0 %v194
  %485 = vmatprep.subr.mxu0 0.0
  %486 = vmatpush1.msra.mxu0 %v195
  %487 = vmatprep.subr.mxu0 0.0
  %488 = vmatpush1.msra.mxu0 %v196
  %489 = vmatprep.mubr.f32.mxu0 %v24
  %490 = vmatmul.mubr.f32.gmra.mrb[0].mxu0 %v23
  %v491 = vpop.f32.mrb[0].mxu0
  %v492 = vadd.f32 %v347, %v491
  %v493 = vpop.f32.mrb[0].mxu0
  %494 = vmatprep.mubr.f32.mxu0 %v31
  %495 = vmatmul.mubr.f32.gmra.mrb[0].mxu0 %v30
  %v496 = vpop.f32.mrb[0].mxu0
  %v497 = vadd.f32 %v352, %v496
  %v498 = vpop.f32.mrb[0].mxu0
  %499 = vmatprep.mubr.f32.mxu0 %v38
  %500 = vmatmul.mubr.f32.gmra.mrb[0].mxu0 %v37
  %v501 = vpop.f32.mrb[0].mxu0
  %v502 = vadd.f32 %v357, %v501
  %v503 = vpop.f32.mrb[0].mxu0
  %504 = vmatprep.mubr.f32.mxu0 %v45
  %505 = vmatmul.mubr.f32.gmra.mrb[0].mxu0 %v44
  %v506 = vpop.f32.mrb[0].mxu0
  %v507 = vadd.f32 %v362, %v506
  %v508 = vpop.f32.mrb[0].mxu0
  %509 = vmatprep.mubr.f32.mxu0 %v52
  %510 = vmatmul.mubr.f32.gmra.mrb[0].mxu0 %v51
  %v511 = vpop.f32.mrb[0].mxu0
  %v512 = vadd.f32 %v367, %v511
  %v513 = vpop.f32.mrb[0].mxu0
  %514 = vmatprep.mubr.f32.mxu0 %v59
  %515 = vmatmul.mubr.f32.gmra.mrb[0].mxu0 %v58
  %v516 = vpop.f32.mrb[0].mxu0
  %v517 = vadd.f32 %v372, %v516
  %v518 = vpop.f32.mrb[0].mxu0
  %519 = vmatprep.mubr.f32.mxu0 %v66
  %520 = vmatmul.mubr.f32.gmra.mrb[0].mxu0 %v65
  %v521 = vpop.f32.mrb[0].mxu0
  %v522 = vadd.f32 %v377, %v521
  %v523 = vpop.f32.mrb[0].mxu0
  %524 = vmatprep.mubr.f32.mxu0 %v73
  %525 = vmatmul.mubr.f32.gmra.mrb[0].mxu0 %v72
  %v526 = vpop.f32.mrb[0].mxu0
  %v527 = vadd.f32 %v382, %v526
  %v528 = vpop.f32.mrb[0].mxu0
  %529 = vmatprep.mubr.f32.mxu0 %v80
  %530 = vmatmul.mubr.f32.gmra.mrb[0].mxu0 %v79
  %v531 = vpop.f32.mrb[0].mxu0
  %v532 = vadd.f32 %v387, %v531
  %v533 = vpop.f32.mrb[0].mxu0
  %534 = vmatprep.mubr.f32.mxu0 %v87
  %535 = vmatmul.mubr.f32.gmra.mrb[0].mxu0 %v86
  %v536 = vpop.f32.mrb[0].mxu0
  %v537 = vadd.f32 %v392, %v536
  %v538 = vpop.f32.mrb[0].mxu0
  %539 = vmatprep.mubr.f32.mxu0 %v94
  %540 = vmatmul.mubr.f32.gmra.mrb[0].mxu0 %v93
  %v541 = vpop.f32.mrb[0].mxu0
  %v542 = vadd.f32 %v397, %v541
  %v543 = vpop.f32.mrb[0].mxu0
  %544 = vmatprep.mubr.f32.mxu0 %v101
  %545 = vmatmul.mubr.f32.gmra.mrb[0].mxu0 %v100
  %v546 = vpop.f32.mrb[0].mxu0
  %v547 = vadd.f32 %v402, %v546
  %v548 = vpop.f32.mrb[0].mxu0
  %549 = vmatprep.mubr.f32.mxu0 %v108
  %550 = vmatmul.mubr.f32.gmra.mrb[0].mxu0 %v107
  %v551 = vpop.f32.mrb[0].mxu0
  %v552 = vadd.f32 %v407, %v551
  %v553 = vpop.f32.mrb[0].mxu0
  %554 = vmatprep.mubr.f32.mxu0 %v115
  %555 = vmatmul.mubr.f32.gmra.mrb[0].mxu0 %v114
  %v556 = vpop.f32.mrb[0].mxu0
  %v557 = vadd.f32 %v412, %v556
  %v558 = vpop.f32.mrb[0].mxu0
  %559 = vmatprep.mubr.f32.mxu0 %v122
  %560 = vmatmul.mubr.f32.gmra.mrb[0].mxu0 %v121
  %v561 = vpop.f32.mrb[0].mxu0
  %v562 = vadd.f32 %v417, %v561
  %v563 = vpop.f32.mrb[0].mxu0
  %564 = vmatprep.mubr.f32.mxu0 %v129
  %565 = vmatmul.mubr.f32.gmra.mrb[0].mxu0 %v128
  %v566 = vpop.f32.mrb[0].mxu0
  %v567 = vadd.f32 %v422, %v566
  %v568 = vpop.f32.mrb[0].mxu0
  %569 = vdwg.mxu0
  %570 = vmatprep.subr.mxu0 0.0
  %571 = vmatpush1.msra.mxu0 %v197
  %572 = vmatprep.subr.mxu0 0.0
  %573 = vmatpush1.msra.mxu0 %v198
  %574 = vmatprep.subr.mxu0 0.0
  %575 = vmatpush1.msra.mxu0 %v199
  %576 = vmatprep.subr.mxu0 0.0
  %577 = vmatpush1.msra.mxu0 %v200
  %578 = vmatprep.subr.mxu0 0.0
  %579 = vmatpush1.msra.mxu0 %v201
  %580 = vmatprep.subr.mxu0 0.0
  %581 = vmatpush1.msra.mxu0 %v202
  %582 = vmatprep.subr.mxu0 0.0
  %583 = vmatpush1.msra.mxu0 %v203
  %584 = vmatprep.subr.mxu0 0.0
  %585 = vmatpush1.msra.mxu0 %v204
  %586 = vmatprep.subr.mxu0 0.0
  %587 = vmatpush1.msra.mxu0 %v205
  %588 = vmatprep.subr.mxu0 0.0
  %589 = vmatpush1.msra.mxu0 %v206
  %590 = vmatprep.subr.mxu0 0.0
  %591 = vmatpush1.msra.mxu0 %v207
  %592 = vmatprep.subr.mxu0 0.0
  %593 = vmatpush1.msra.mxu0 %v208
  %594 = vmatprep.subr.mxu0 0.0
  %595 = vmatpush1.msra.mxu0 %v209
  %596 = vmatprep.subr.mxu0 0.0
  %597 = vmatpush1.msra.mxu0 %v210
  %598 = vmatprep.subr.mxu0 0.0
  %599 = vmatpush1.msra.mxu0 %v211
  %600 = vmatprep.subr.mxu0 0.0
  %601 = vmatpush1.msra.mxu0 %v212
  %602 = vmatprep.subr.mxu0 0.0
  %603 = vmatpush1.msra.mxu0 %v213
  %604 = vmatprep.subr.mxu0 0.0
  %605 = vmatpush1.msra.mxu0 %v214
  %606 = vmatprep.subr.mxu0 0.0
  %607 = vmatpush1.msra.mxu0 %v215
  %608 = vmatprep.subr.mxu0 0.0
  %609 = vmatpush1.msra.mxu0 %v216
  %610 = vmatprep.subr.mxu0 0.0
  %611 = vmatpush1.msra.mxu0 %v217
  %612 = vmatprep.subr.mxu0 0.0
  %613 = vmatpush1.msra.mxu0 %v218
  %614 = vmatprep.subr.mxu0 0.0
  %615 = vmatpush1.msra.mxu0 %v219
  %616 = vmatprep.subr.mxu0 0.0
  %617 = vmatpush1.msra.mxu0 %v220
  %618 = vmatprep.subr.mxu0 0.0
  %619 = vmatpush1.msra.mxu0 %v221
  %620 = vmatprep.subr.mxu0 0.0
  %621 = vmatpush1.msra.mxu0 %v222
  %622 = vmatprep.subr.mxu0 0.0
  %623 = vmatpush1.msra.mxu0 %v223
  %624 = vmatprep.subr.mxu0 0.0
  %625 = vmatpush1.msra.mxu0 %v224
  %626 = vmatprep.subr.mxu0 0.0
  %627 = vmatpush1.msra.mxu0 %v225
  %628 = vmatprep.subr.mxu0 0.0
  %629 = vmatpush1.msra.mxu0 %v226
  %630 = vmatprep.subr.mxu0 0.0
  %631 = vmatpush1.msra.mxu0 %v227
  %632 = vmatprep.subr.mxu0 0.0
  %633 = vmatpush1.msra.mxu0 %v228
  %634 = vmatprep.mubr.f32.mxu0 %v26
  %635 = vmatmul.mubr.f32.gmra.mrb[0].mxu0 %v25
  %v636 = vpop.f32.mrb[0].mxu0
  %v637 = vadd.f32 %v492, %v636
  %v638 = vpop.f32.mrb[0].mxu0
  %639 = vmatprep.mubr.f32.mxu0 %v33
  %640 = vmatmul.mubr.f32.gmra.mrb[0].mxu0 %v32
  %v641 = vpop.f32.mrb[0].mxu0
  %v642 = vadd.f32 %v497, %v641
  %v643 = vpop.f32.mrb[0].mxu0
  %644 = vmatprep.mubr.f32.mxu0 %v40
  %645 = vmatmul.mubr.f32.gmra.mrb[0].mxu0 %v39
  %v646 = vpop.f32.mrb[0].mxu0
  %v647 = vadd.f32 %v502, %v646
  %v648 = vpop.f32.mrb[0].mxu0
  %649 = vmatprep.mubr.f32.mxu0 %v47
  %650 = vmatmul.mubr.f32.gmra.mrb[0].mxu0 %v46
  %v651 = vpop.f32.mrb[0].mxu0
  %v652 = vadd.f32 %v507, %v651
  %v653 = vpop.f32.mrb[0].mxu0
  %654 = vmatprep.mubr.f32.mxu0 %v54
  %655 = vmatmul.mubr.f32.gmra.mrb[0].mxu0 %v53
  %v656 = vpop.f32.mrb[0].mxu0
  %v657 = vadd.f32 %v512, %v656
  %v658 = vpop.f32.mrb[0].mxu0
  %659 = vmatprep.mubr.f32.mxu0 %v61
  %660 = vmatmul.mubr.f32.gmra.mrb[0].mxu0 %v60
  %v661 = vpop.f32.mrb[0].mxu0
  %v662 = vadd.f32 %v517, %v661
  %v663 = vpop.f32.mrb[0].mxu0
  %664 = vmatprep.mubr.f32.mxu0 %v68
  %665 = vmatmul.mubr.f32.gmra.mrb[0].mxu0 %v67
  %v666 = vpop.f32.mrb[0].mxu0
  %v667 = vadd.f32 %v522, %v666
  %v668 = vpop.f32.mrb[0].mxu0
  %669 = vmatprep.mubr.f32.mxu0 %v75
  %670 = vmatmul.mubr.f32.gmra.mrb[0].mxu0 %v74
  %v671 = vpop.f32.mrb[0].mxu0
  %v672 = vadd.f32 %v527, %v671
  %v673 = vpop.f32.mrb[0].mxu0
  %674 = vmatprep.mubr.f32.mxu0 %v82
  %675 = vmatmul.mubr.f32.gmra.mrb[0].mxu0 %v81
  %v676 = vpop.f32.mrb[0].mxu0
  %v677 = vadd.f32 %v532, %v676
  %v678 = vpop.f32.mrb[0].mxu0
  %679 = vmatprep.mubr.f32.mxu0 %v89
  %680 = vmatmul.mubr.f32.gmra.mrb[0].mxu0 %v88
  %v681 = vpop.f32.mrb[0].mxu0
  %v682 = vadd.f32 %v537, %v681
  %v683 = vpop.f32.mrb[0].mxu0
  %684 = vmatprep.mubr.f32.mxu0 %v96
  %685 = vmatmul.mubr.f32.gmra.mrb[0].mxu0 %v95
  %v686 = vpop.f32.mrb[0].mxu0
  %v687 = vadd.f32 %v542, %v686
  %v688 = vpop.f32.mrb[0].mxu0
  %689 = vmatprep.mubr.f32.mxu0 %v103
  %690 = vmatmul.mubr.f32.gmra.mrb[0].mxu0 %v102
  %v691 = vpop.f32.mrb[0].mxu0
  %v692 = vadd.f32 %v547, %v691
  %v693 = vpop.f32.mrb[0].mxu0
  %694 = vmatprep.mubr.f32.mxu0 %v110
  %695 = vmatmul.mubr.f32.gmra.mrb[0].mxu0 %v109
  %v696 = vpop.f32.mrb[0].mxu0
  %v697 = vadd.f32 %v552, %v696
  %v698 = vpop.f32.mrb[0].mxu0
  %699 = vmatprep.mubr.f32.mxu0 %v117
  %700 = vmatmul.mubr.f32.gmra.mrb[0].mxu0 %v116
  %v701 = vpop.f32.mrb[0].mxu0
  %v702 = vadd.f32 %v557, %v701
  %v703 = vpop.f32.mrb[0].mxu0
  %704 = vmatprep.mubr.f32.mxu0 %v124
  %705 = vmatmul.mubr.f32.gmra.mrb[0].mxu0 %v123
  %v706 = vpop.f32.mrb[0].mxu0
  %v707 = vadd.f32 %v562, %v706
  %v708 = vpop.f32.mrb[0].mxu0
  %709 = vmatprep.mubr.f32.mxu0 %v131
  %710 = vmatmul.mubr.f32.gmra.mrb[0].mxu0 %v130
  %v711 = vpop.f32.mrb[0].mxu0
  %v712 = vadd.f32 %v567, %v711
  %v713 = vpop.f32.mrb[0].mxu0
  %714 = vdwg.mxu0
  %715 = vmatprep.subr.mxu0 0.0
  %716 = vmatpush1.msra.mxu0 %v229
  %717 = vmatprep.subr.mxu0 0.0
  %718 = vmatpush1.msra.mxu0 %v230
  %719 = vmatprep.subr.mxu0 0.0
  %720 = vmatpush1.msra.mxu0 0.0
  %721 = vmatprep.subr.mxu0 0.0
  %722 = vmatpush1.msra.mxu0 0.0
  %723 = vmatprep.subr.mxu0 0.0
  %724 = vmatpush1.msra.mxu0 0.0
  %725 = vmatprep.subr.mxu0 0.0
  %726 = vmatpush1.msra.mxu0 0.0
  %727 = vmatprep.subr.mxu0 0.0
  %728 = vmatpush1.msra.mxu0 0.0
  %729 = vmatprep.subr.mxu0 0.0
  %730 = vmatpush1.msra.mxu0 0.0
  %731 = vmatprep.subr.mxu0 0.0
  %732 = vmatpush1.msra.mxu0 0.0
  %733 = vmatprep.subr.mxu0 0.0
  %734 = vmatpush1.msra.mxu0 0.0
  %735 = vmatprep.subr.mxu0 0.0
  %736 = vmatpush1.msra.mxu0 0.0
  %737 = vmatprep.subr.mxu0 0.0
  %738 = vmatpush1.msra.mxu0 0.0
  %739 = vmatprep.subr.mxu0 0.0
  %740 = vmatpush1.msra.mxu0 0.0
  %741 = vmatprep.subr.mxu0 0.0
  %742 = vmatpush1.msra.mxu0 0.0
  %743 = vmatprep.subr.mxu0 0.0
  %744 = vmatpush1.msra.mxu0 0.0
  %745 = vmatprep.subr.mxu0 0.0
  %746 = vmatpush1.msra.mxu0 0.0
  %747 = vmatprep.subr.mxu0 0.0
  %748 = vmatpush1.msra.mxu0 0.0
  %749 = vmatprep.subr.mxu0 0.0
  %750 = vmatpush1.msra.mxu0 0.0
  %751 = vmatprep.subr.mxu0 0.0
  %752 = vmatpush1.msra.mxu0 0.0
  %753 = vmatprep.subr.mxu0 0.0
  %754 = vmatpush1.msra.mxu0 0.0
  %755 = vmatprep.subr.mxu0 0.0
  %756 = vmatpush1.msra.mxu0 0.0
  %757 = vmatprep.subr.mxu0 0.0
  %758 = vmatpush1.msra.mxu0 0.0
  %759 = vmatprep.subr.mxu0 0.0
  %760 = vmatpush1.msra.mxu0 0.0
  %761 = vmatprep.subr.mxu0 0.0
  %762 = vmatpush1.msra.mxu0 0.0
  %763 = vmatprep.subr.mxu0 0.0
  %764 = vmatpush1.msra.mxu0 0.0
  %765 = vmatprep.subr.mxu0 0.0
  %766 = vmatpush1.msra.mxu0 0.0
  %767 = vmatprep.subr.mxu0 0.0
  %768 = vmatpush1.msra.mxu0 0.0
  %769 = vmatprep.subr.mxu0 0.0
  %770 = vmatpush1.msra.mxu0 0.0
  %771 = vmatprep.subr.mxu0 0.0
  %772 = vmatpush1.msra.mxu0 0.0
  %773 = vmatprep.subr.mxu0 0.0
  %774 = vmatpush1.msra.mxu0 0.0
  %775 = vmatprep.subr.mxu0 0.0
  %776 = vmatpush1.msra.mxu0 0.0
  %777 = vmatprep.subr.mxu0 0.0
  %778 = vmatpush1.msra.mxu0 0.0
  %779 = vmatprep.mubr.f32.mxu0 0.0
  %780 = vmatmul.mubr.f32.gmra.mrb[0].mxu0 %v233
  %v781 = vpop.f32.mrb[0].mxu0
  %v782 = vadd.f32 %v637, %v781
  %v783 = vpop.f32.mrb[0].mxu0
  %784 = vmatprep.mubr.f32.mxu0 0.0
  %785 = vmatmul.mubr.f32.gmra.mrb[0].mxu0 %v236
  %v786 = vpop.f32.mrb[0].mxu0
  %v787 = vadd.f32 %v642, %v786
  %v788 = vpop.f32.mrb[0].mxu0
  %789 = vmatprep.mubr.f32.mxu0 0.0
  %790 = vmatmul.mubr.f32.gmra.mrb[0].mxu0 %v239
  %v791 = vpop.f32.mrb[0].mxu0
  %v792 = vadd.f32 %v647, %v791
  %v793 = vpop.f32.mrb[0].mxu0
  %794 = vmatprep.mubr.f32.mxu0 0.0
  %795 = vmatmul.mubr.f32.gmra.mrb[0].mxu0 %v242
  %v796 = vpop.f32.mrb[0].mxu0
  %v797 = vadd.f32 %v652, %v796
  %v798 = vpop.f32.mrb[0].mxu0
  %799 = vmatprep.mubr.f32.mxu0 0.0
  %800 = vmatmul.mubr.f32.gmra.mrb[0].mxu0 %v245
  %v801 = vpop.f32.mrb[0].mxu0
  %v802 = vadd.f32 %v657, %v801
  %v803 = vpop.f32.mrb[0].mxu0
  %804 = vmatprep.mubr.f32.mxu0 0.0
  %805 = vmatmul.mubr.f32.gmra.mrb[0].mxu0 %v248
  %v806 = vpop.f32.mrb[0].mxu0
  %v807 = vadd.f32 %v662, %v806
  %v808 = vpop.f32.mrb[0].mxu0
  %809 = vmatprep.mubr.f32.mxu0 0.0
  %810 = vmatmul.mubr.f32.gmra.mrb[0].mxu0 %v251
  %v811 = vpop.f32.mrb[0].mxu0
  %v812 = vadd.f32 %v667, %v811
  %v813 = vpop.f32.mrb[0].mxu0
  %814 = vmatprep.mubr.f32.mxu0 0.0
  %815 = vmatmul.mubr.f32.gmra.mrb[0].mxu0 %v254
  %v816 = vpop.f32.mrb[0].mxu0
  %v817 = vadd.f32 %v672, %v816
  %v818 = vpop.f32.mrb[0].mxu0
  %819 = vmatprep.mubr.f32.mxu0 0.0
  %820 = vmatmul.mubr.f32.gmra.mrb[0].mxu0 %v257
  %v821 = vpop.f32.mrb[0].mxu0
  %v822 = vadd.f32 %v677, %v821
  %v823 = vpop.f32.mrb[0].mxu0
  %824 = vmatprep.mubr.f32.mxu0 0.0
  %825 = vmatmul.mubr.f32.gmra.mrb[0].mxu0 %v260
  %v826 = vpop.f32.mrb[0].mxu0
  %v827 = vadd.f32 %v682, %v826
  %v828 = vpop.f32.mrb[0].mxu0
  %829 = vmatprep.mubr.f32.mxu0 0.0
  %830 = vmatmul.mubr.f32.gmra.mrb[0].mxu0 %v263
  %v831 = vpop.f32.mrb[0].mxu0
  %v832 = vadd.f32 %v687, %v831
  %v833 = vpop.f32.mrb[0].mxu0
  %834 = vmatprep.mubr.f32.mxu0 0.0
  %835 = vmatmul.mubr.f32.gmra.mrb[0].mxu0 %v266
  %v836 = vpop.f32.mrb[0].mxu0
  %v837 = vadd.f32 %v692, %v836
  %v838 = vpop.f32.mrb[0].mxu0
  %839 = vmatprep.mubr.f32.mxu0 0.0
  %840 = vmatmul.mubr.f32.gmra.mrb[0].mxu0 %v269
  %v841 = vpop.f32.mrb[0].mxu0
  %v842 = vadd.f32 %v697, %v841
  %v843 = vpop.f32.mrb[0].mxu0
  %844 = vmatprep.mubr.f32.mxu0 0.0
  %845 = vmatmul.mubr.f32.gmra.mrb[0].mxu0 %v272
  %v846 = vpop.f32.mrb[0].mxu0
  %v847 = vadd.f32 %v702, %v846
  %v848 = vpop.f32.mrb[0].mxu0
  %849 = vmatprep.mubr.f32.mxu0 0.0
  %850 = vmatmul.mubr.f32.gmra.mrb[0].mxu0 %v275
  %v851 = vpop.f32.mrb[0].mxu0
  %v852 = vadd.f32 %v707, %v851
  %v853 = vpop.f32.mrb[0].mxu0
  %854 = vmatprep.mubr.f32.mxu0 0.0
  %855 = vmatmul.mubr.f32.gmra.mrb[0].mxu0 %v278
  %v856 = vpop.f32.mrb[0].mxu0
  %v857 = vadd.f32 %v712, %v856
  %v858 = vpop.f32.mrb[0].mxu0
  %859 = vdwg.mxu0
  %v860 = vadd.f32 %v782, %v787
  %v861 = vadd.f32 %v860, %v792
  %v862 = vadd.f32 %v861, %v797
  %v863 = vadd.f32 %v862, %v802
  %v864 = vadd.f32 %v863, %v807
  %v865 = vadd.f32 %v864, %v812
  %v866 = vadd.f32 %v865, %v817
  %v867 = vadd.f32 %v866, %v822
  %v868 = vadd.f32 %v867, %v827
  %v869 = vadd.f32 %v868, %v832
  %v870 = vadd.f32 %v869, %v837
  %v871 = vadd.f32 %v870, %v842
  %v872 = vadd.f32 %v871, %v847
  %v873 = vadd.f32 %v872, %v852
  %v874 = vadd.f32 %v873, %v857
  %v875 = vrot.slane %v874, 4
  %v876 = vadd.f32 %v874, %v875
  %v877 = vrot.slane %v876, 2
  %v878 = vadd.f32 %v876, %v877
  %v879 = vrot.slane %v878, 1
  %v880 = vadd.f32 %v878, %v879
  %v881 = vmul.f32 %v880, 0.0078125
  %v882 = vsub.f32 %v782, %v881
  %v883 = vsub.f32 %v787, %v881
  %v884 = vsub.f32 %v792, %v881
  %v885 = vsub.f32 %v797, %v881
  %v886 = vsub.f32 %v802, %v881
  %v887 = vsub.f32 %v807, %v881
  %v888 = vsub.f32 %v812, %v881
  %v889 = vsub.f32 %v817, %v881
  %v890 = vsub.f32 %v822, %v881
  %v891 = vsub.f32 %v827, %v881
  %v892 = vsub.f32 %v832, %v881
  %v893 = vsub.f32 %v837, %v881
  %v894 = vsub.f32 %v842, %v881
  %v895 = vsub.f32 %v847, %v881
  %v896 = vsub.f32 %v852, %v881
  %v897 = vsub.f32 %v857, %v881
  %v898 = vmul.f32 %v882, %v882
  %v899 = vmul.f32 %v883, %v883
  %v900 = vmul.f32 %v884, %v884
  %v901 = vmul.f32 %v885, %v885
  %v902 = vmul.f32 %v886, %v886
  %v903 = vmul.f32 %v887, %v887
  %v904 = vmul.f32 %v888, %v888
  %v905 = vmul.f32 %v889, %v889
  %v906 = vmul.f32 %v890, %v890
  %v907 = vmul.f32 %v891, %v891
  %v908 = vmul.f32 %v892, %v892
  %v909 = vmul.f32 %v893, %v893
  %v910 = vmul.f32 %v894, %v894
  %v911 = vmul.f32 %v895, %v895
  %v912 = vmul.f32 %v896, %v896
  %v913 = vmul.f32 %v897, %v897
  %v914 = vadd.f32 %v898, %v899
  %v915 = vadd.f32 %v914, %v900
  %v916 = vadd.f32 %v915, %v901
  %v917 = vadd.f32 %v916, %v902
  %v918 = vadd.f32 %v917, %v903
  %v919 = vadd.f32 %v918, %v904
  %v920 = vadd.f32 %v919, %v905
  %v921 = vadd.f32 %v920, %v906
  %v922 = vadd.f32 %v921, %v907
  %v923 = vadd.f32 %v922, %v908
  %v924 = vadd.f32 %v923, %v909
  %v925 = vadd.f32 %v924, %v910
  %v926 = vadd.f32 %v925, %v911
  %v927 = vadd.f32 %v926, %v912
  %v928 = vadd.f32 %v927, %v913
  %v929 = vrot.slane %v928, 4
  %v930 = vadd.f32 %v928, %v929
  %v931 = vrot.slane %v930, 2
  %v932 = vadd.f32 %v930, %v931
  %v933 = vrot.slane %v932, 1
  %v934 = vadd.f32 %v932, %v933
  %v935 = vmul.f32 %v934, 0.0078125
  %v936 = vadd.f32 %v935, 1e-05
  %v937 = vrsqrt.pop %v936
  %v938 = vmul.f32 %v937, %v20
  %v939 = vlaneseq
  %v940 = vshrl.u32 %v939, 7
  %v941 = vsub.s32 0, %v940
  %v942 = vrot.slane %v938, %v941
  %v943 = vmul.f32 %v882, %v942
  %v944 = vmul.f32 %v883, %v942
  %v945 = vmul.f32 %v884, %v942
  %v946 = vmul.f32 %v885, %v942
  %v947 = vmul.f32 %v886, %v942
  %v948 = vmul.f32 %v887, %v942
  %v949 = vmul.f32 %v888, %v942
  %v950 = vmul.f32 %v889, %v942
  %v951 = vmul.f32 %v890, %v942
  %v952 = vmul.f32 %v891, %v942
  %v953 = vmul.f32 %v892, %v942
  %v954 = vmul.f32 %v893, %v942
  %v955 = vmul.f32 %v894, %v942
  %v956 = vmul.f32 %v895, %v942
  %v957 = vmul.f32 %v896, %v942
  %v958 = vmul.f32 %v897, %v942
  %v959 = vlaneseq
  %v960 = vshrl.u32 %v959, 7
  %v961 = vsub.s32 1, %v960
  %v962 = vrot.slane %v20, %v961
  %v963 = vadd.f32 %v943, %v962
  %v964 = vadd.f32 %v944, %v962
  %v965 = vadd.f32 %v945, %v962
  %v966 = vadd.f32 %v946, %v962
  %v967 = vadd.f32 %v947, %v962
  %v968 = vadd.f32 %v948, %v962
  %v969 = vadd.f32 %v949, %v962
  %v970 = vadd.f32 %v950, %v962
  %v971 = vadd.f32 %v951, %v962
  %v972 = vadd.f32 %v952, %v962
  %v973 = vadd.f32 %v953, %v962
  %v974 = vadd.f32 %v954, %v962
  %v975 = vadd.f32 %v955, %v962
  %v976 = vadd.f32 %v956, %v962
  %v977 = vadd.f32 %v957, %v962
  %v978 = vadd.f32 %v958, %v962
  %v979 = vmax.f32 %v963, 0.0
  %v980 = vmax.f32 %v964, 0.0
  %v981 = vmax.f32 %v965, 0.0
  %v982 = vmax.f32 %v966, 0.0
  %v983 = vmax.f32 %v967, 0.0
  %v984 = vmax.f32 %v968, 0.0
  %v985 = vmax.f32 %v969, 0.0
  %v986 = vmax.f32 %v970, 0.0
  %v987 = vmax.f32 %v971, 0.0
  %v988 = vmax.f32 %v972, 0.0
  %v989 = vmax.f32 %v973, 0.0
  %v990 = vmax.f32 %v974, 0.0
  %v991 = vmax.f32 %v975, 0.0
  %v992 = vmax.f32 %v976, 0.0
  %v993 = vmax.f32 %v977, 0.0
  %v994 = vmax.f32 %v978, 0.0
  %v995 = vld [vmem:[%s2] sm:$0xff]
  %v996 = vld [vmem:[%s2 + $0x8] sm:$0xff]
  %v997 = vld [vmem:[%s2 + $0x10] sm:$0xff]
  %v998 = vld [vmem:[%s2 + $0x18] sm:$0xff]
  %v999 = vld [vmem:[%s2 + $0x20] sm:$0xff]
  %v1000 = vld [vmem:[%s2 + $0x28] sm:$0xff]
  %v1001 = vld [vmem:[%s2 + $0x30] sm:$0xff]
  %v1002 = vld [vmem:[%s2 + $0x38] sm:$0xff]
  %v1003 = vld [vmem:[%s2 + $0x40] sm:$0xff]
  %v1004 = vld [vmem:[%s2 + $0x48] sm:$0xff]
  %v1005 = vld [vmem:[%s2 + $0x50] sm:$0xff]
  %v1006 = vld [vmem:[%s2 + $0x58] sm:$0xff]
  %v1007 = vld [vmem:[%s2 + $0x60] sm:$0xff]
  %v1008 = vld [vmem:[%s2 + $0x68] sm:$0xff]
  %v1009 = vld [vmem:[%s2 + $0x70] sm:$0xff]
  %v1010 = vld [vmem:[%s2 + $0x78] sm:$0xff]
  %1011 = vmatprep.subr.mxu0 0.0
  %1012 = vmatpush1.msra.mxu0 %v995
  %1013 = vmatprep.subr.mxu0 0.0
  %1014 = vmatpush1.msra.mxu0 %v996
  %1015 = vmatprep.subr.mxu0 0.0
  %1016 = vmatpush1.msra.mxu0 %v997
  %1017 = vmatprep.subr.mxu0 0.0
  %1018 = vmatpush1.msra.mxu0 %v998
  %1019 = vmatprep.subr.mxu0 0.0
  %1020 = vmatpush1.msra.mxu0 %v999
  %1021 = vmatprep.subr.mxu0 0.0
  %1022 = vmatpush1.msra.mxu0 %v1000
  %1023 = vmatprep.subr.mxu0 0.0
  %1024 = vmatpush1.msra.mxu0 %v1001
  %1025 = vmatprep.subr.mxu0 0.0
  %1026 = vmatpush1.msra.mxu0 %v1002
  %1027 = vmatprep.subr.mxu0 0.0
  %1028 = vmatpush1.msra.mxu0 %v1003
  %1029 = vmatprep.subr.mxu0 0.0
  %1030 = vmatpush1.msra.mxu0 %v1004
  %1031 = vmatprep.subr.mxu0 0.0
  %1032 = vmatpush1.msra.mxu0 %v1005
  %1033 = vmatprep.subr.mxu0 0.0
  %1034 = vmatpush1.msra.mxu0 %v1006
  %1035 = vmatprep.subr.mxu0 0.0
  %1036 = vmatpush1.msra.mxu0 %v1007
  %1037 = vmatprep.subr.mxu0 0.0
  %1038 = vmatpush1.msra.mxu0 %v1008
  %1039 = vmatprep.subr.mxu0 0.0
  %1040 = vmatpush1.msra.mxu0 %v1009
  %1041 = vmatprep.subr.mxu0 0.0
  %1042 = vmatpush1.msra.mxu0 %v1010
  %1043 = vmatprep.subr.mxu0 0.0
  %1044 = vmatpush1.msra.mxu0 0.0
  %1045 = vmatprep.subr.mxu0 0.0
  %1046 = vmatpush1.msra.mxu0 0.0
  %1047 = vmatprep.subr.mxu0 0.0
  %1048 = vmatpush1.msra.mxu0 0.0
  %1049 = vmatprep.subr.mxu0 0.0
  %1050 = vmatpush1.msra.mxu0 0.0
  %1051 = vmatprep.subr.mxu0 0.0
  %1052 = vmatpush1.msra.mxu0 0.0
  %1053 = vmatprep.subr.mxu0 0.0
  %1054 = vmatpush1.msra.mxu0 0.0
  %1055 = vmatprep.subr.mxu0 0.0
  %1056 = vmatpush1.msra.mxu0 0.0
  %1057 = vmatprep.subr.mxu0 0.0
  %1058 = vmatpush1.msra.mxu0 0.0
  %1059 = vmatprep.subr.mxu0 0.0
  %1060 = vmatpush1.msra.mxu0 0.0
  %1061 = vmatprep.subr.mxu0 0.0
  %1062 = vmatpush1.msra.mxu0 0.0
  %1063 = vmatprep.subr.mxu0 0.0
  %1064 = vmatpush1.msra.mxu0 0.0
  %1065 = vmatprep.subr.mxu0 0.0
  %1066 = vmatpush1.msra.mxu0 0.0
  %1067 = vmatprep.subr.mxu0 0.0
  %1068 = vmatpush1.msra.mxu0 0.0
  %1069 = vmatprep.subr.mxu0 0.0
  %1070 = vmatpush1.msra.mxu0 0.0
  %1071 = vmatprep.subr.mxu0 0.0
  %1072 = vmatpush1.msra.mxu0 0.0
  %1073 = vmatprep.subr.mxu0 0.0
  %1074 = vmatpush1.msra.mxu0 0.0
  %1075 = vmatprep.mubr.f32.mxu0 0.0
  %1076 = vmatmul.mubr.f32.gmra.mrb[0].mxu0 %v979
  %v1077 = vpop.f32.mrb[0].mxu0
  %v1078 = vadd.f32 0.0, %v1077
  %v1079 = vpop.f32.mrb[0].mxu0
  %1080 = vmatprep.mubr.f32.mxu0 0.0
  %1081 = vmatmul.mubr.f32.gmra.mrb[0].mxu0 %v980
  %v1082 = vpop.f32.mrb[0].mxu0
  %v1083 = vadd.f32 0.0, %v1082
  %v1084 = vpop.f32.mrb[0].mxu0
  %1085 = vmatprep.mubr.f32.mxu0 0.0
  %1086 = vmatmul.mubr.f32.gmra.mrb[0].mxu0 %v981
  %v1087 = vpop.f32.mrb[0].mxu0
  %v1088 = vadd.f32 0.0, %v1087
  %v1089 = vpop.f32.mrb[0].mxu0
  %1090 = vmatprep.mubr.f32.mxu0 0.0
  %1091 = vmatmul.mubr.f32.gmra.mrb[0].mxu0 %v982
  %v1092 = vpop.f32.mrb[0].mxu0
  %v1093 = vadd.f32 0.0, %v1092
  %v1094 = vpop.f32.mrb[0].mxu0
  %1095 = vmatprep.mubr.f32.mxu0 0.0
  %1096 = vmatmul.mubr.f32.gmra.mrb[0].mxu0 %v983
  %v1097 = vpop.f32.mrb[0].mxu0
  %v1098 = vadd.f32 0.0, %v1097
  %v1099 = vpop.f32.mrb[0].mxu0
  %1100 = vmatprep.mubr.f32.mxu0 0.0
  %1101 = vmatmul.mubr.f32.gmra.mrb[0].mxu0 %v984
  %v1102 = vpop.f32.mrb[0].mxu0
  %v1103 = vadd.f32 0.0, %v1102
  %v1104 = vpop.f32.mrb[0].mxu0
  %1105 = vmatprep.mubr.f32.mxu0 0.0
  %1106 = vmatmul.mubr.f32.gmra.mrb[0].mxu0 %v985
  %v1107 = vpop.f32.mrb[0].mxu0
  %v1108 = vadd.f32 0.0, %v1107
  %v1109 = vpop.f32.mrb[0].mxu0
  %1110 = vmatprep.mubr.f32.mxu0 0.0
  %1111 = vmatmul.mubr.f32.gmra.mrb[0].mxu0 %v986
  %v1112 = vpop.f32.mrb[0].mxu0
  %v1113 = vadd.f32 0.0, %v1112
  %v1114 = vpop.f32.mrb[0].mxu0
  %1115 = vmatprep.mubr.f32.mxu0 0.0
  %1116 = vmatmul.mubr.f32.gmra.mrb[0].mxu0 %v987
  %v1117 = vpop.f32.mrb[0].mxu0
  %v1118 = vadd.f32 0.0, %v1117
  %v1119 = vpop.f32.mrb[0].mxu0
  %1120 = vmatprep.mubr.f32.mxu0 0.0
  %1121 = vmatmul.mubr.f32.gmra.mrb[0].mxu0 %v988
  %v1122 = vpop.f32.mrb[0].mxu0
  %v1123 = vadd.f32 0.0, %v1122
  %v1124 = vpop.f32.mrb[0].mxu0
  %1125 = vmatprep.mubr.f32.mxu0 0.0
  %1126 = vmatmul.mubr.f32.gmra.mrb[0].mxu0 %v989
  %v1127 = vpop.f32.mrb[0].mxu0
  %v1128 = vadd.f32 0.0, %v1127
  %v1129 = vpop.f32.mrb[0].mxu0
  %1130 = vmatprep.mubr.f32.mxu0 0.0
  %1131 = vmatmul.mubr.f32.gmra.mrb[0].mxu0 %v990
  %v1132 = vpop.f32.mrb[0].mxu0
  %v1133 = vadd.f32 0.0, %v1132
  %v1134 = vpop.f32.mrb[0].mxu0
  %1135 = vmatprep.mubr.f32.mxu0 0.0
  %1136 = vmatmul.mubr.f32.gmra.mrb[0].mxu0 %v991
  %v1137 = vpop.f32.mrb[0].mxu0
  %v1138 = vadd.f32 0.0, %v1137
  %v1139 = vpop.f32.mrb[0].mxu0
  %1140 = vmatprep.mubr.f32.mxu0 0.0
  %1141 = vmatmul.mubr.f32.gmra.mrb[0].mxu0 %v992
  %v1142 = vpop.f32.mrb[0].mxu0
  %v1143 = vadd.f32 0.0, %v1142
  %v1144 = vpop.f32.mrb[0].mxu0
  %1145 = vmatprep.mubr.f32.mxu0 0.0
  %1146 = vmatmul.mubr.f32.gmra.mrb[0].mxu0 %v993
  %v1147 = vpop.f32.mrb[0].mxu0
  %v1148 = vadd.f32 0.0, %v1147
  %v1149 = vpop.f32.mrb[0].mxu0
  %1150 = vmatprep.mubr.f32.mxu0 0.0
  %1151 = vmatmul.mubr.f32.gmra.mrb[0].mxu0 %v994
  %v1152 = vpop.f32.mrb[0].mxu0
  %v1153 = vadd.f32 0.0, %v1152
  %v1154 = vpop.f32.mrb[0].mxu0
  %1155 = vdwg.mxu0
  %v1156 = vadd.f32 %v1078, %v1083
  %v1157 = vadd.f32 %v1156, %v1088
  %v1158 = vadd.f32 %v1157, %v1093
  %v1159 = vadd.f32 %v1158, %v1098
  %v1160 = vadd.f32 %v1159, %v1103
  %v1161 = vadd.f32 %v1160, %v1108
  %v1162 = vadd.f32 %v1161, %v1113
  %v1163 = vadd.f32 %v1162, %v1118
  %v1164 = vadd.f32 %v1163, %v1123
  %v1165 = vadd.f32 %v1164, %v1128
  %v1166 = vadd.f32 %v1165, %v1133
  %v1167 = vadd.f32 %v1166, %v1138
  %v1168 = vadd.f32 %v1167, %v1143
  %v1169 = vadd.f32 %v1168, %v1148
  %v1170 = vadd.f32 %v1169, %v1153
  %v1171 = vrot.slane %v1170, 4
  %v1172 = vadd.f32 %v1170, %v1171
  %v1173 = vrot.slane %v1172, 2
  %v1174 = vadd.f32 %v1172, %v1173
  %v1175 = vrot.slane %v1174, 1
  %v1176 = vadd.f32 %v1174, %v1175
  %v1177 = vmul.f32 %v1176, 0.0078125
  %v1178 = vsub.f32 %v1078, %v1177
  %v1179 = vsub.f32 %v1083, %v1177
  %v1180 = vsub.f32 %v1088, %v1177
  %v1181 = vsub.f32 %v1093, %v1177
  %v1182 = vsub.f32 %v1098, %v1177
  %v1183 = vsub.f32 %v1103, %v1177
  %v1184 = vsub.f32 %v1108, %v1177
  %v1185 = vsub.f32 %v1113, %v1177
  %v1186 = vsub.f32 %v1118, %v1177
  %v1187 = vsub.f32 %v1123, %v1177
  %v1188 = vsub.f32 %v1128, %v1177
  %v1189 = vsub.f32 %v1133, %v1177
  %v1190 = vsub.f32 %v1138, %v1177
  %v1191 = vsub.f32 %v1143, %v1177
  %v1192 = vsub.f32 %v1148, %v1177
  %v1193 = vsub.f32 %v1153, %v1177
  %v1194 = vmul.f32 %v1178, %v1178
  %v1195 = vmul.f32 %v1179, %v1179
  %v1196 = vmul.f32 %v1180, %v1180
  %v1197 = vmul.f32 %v1181, %v1181
  %v1198 = vmul.f32 %v1182, %v1182
  %v1199 = vmul.f32 %v1183, %v1183
  %v1200 = vmul.f32 %v1184, %v1184
  %v1201 = vmul.f32 %v1185, %v1185
  %v1202 = vmul.f32 %v1186, %v1186
  %v1203 = vmul.f32 %v1187, %v1187
  %v1204 = vmul.f32 %v1188, %v1188
  %v1205 = vmul.f32 %v1189, %v1189
  %v1206 = vmul.f32 %v1190, %v1190
  %v1207 = vmul.f32 %v1191, %v1191
  %v1208 = vmul.f32 %v1192, %v1192
  %v1209 = vmul.f32 %v1193, %v1193
  %v1210 = vadd.f32 %v1194, %v1195
  %v1211 = vadd.f32 %v1210, %v1196
  %v1212 = vadd.f32 %v1211, %v1197
  %v1213 = vadd.f32 %v1212, %v1198
  %v1214 = vadd.f32 %v1213, %v1199
  %v1215 = vadd.f32 %v1214, %v1200
  %v1216 = vadd.f32 %v1215, %v1201
  %v1217 = vadd.f32 %v1216, %v1202
  %v1218 = vadd.f32 %v1217, %v1203
  %v1219 = vadd.f32 %v1218, %v1204
  %v1220 = vadd.f32 %v1219, %v1205
  %v1221 = vadd.f32 %v1220, %v1206
  %v1222 = vadd.f32 %v1221, %v1207
  %v1223 = vadd.f32 %v1222, %v1208
  %v1224 = vadd.f32 %v1223, %v1209
  %v1225 = vrot.slane %v1224, 4
  %v1226 = vadd.f32 %v1224, %v1225
  %v1227 = vrot.slane %v1226, 2
  %v1228 = vadd.f32 %v1226, %v1227
  %v1229 = vrot.slane %v1228, 1
  %v1230 = vadd.f32 %v1228, %v1229
  %v1231 = vmul.f32 %v1230, 0.0078125
  %v1232 = vadd.f32 %v1231, 1e-05
  %v1233 = vrsqrt.pop %v1232
  %v1234 = vmul.f32 %v1233, %v20
  %v1235 = vlaneseq
  %v1236 = vshrl.u32 %v1235, 7
  %v1237 = vsub.s32 2, %v1236
  %v1238 = vrot.slane %v1234, %v1237
  %v1239 = vmul.f32 %v1178, %v1238
  %v1240 = vmul.f32 %v1179, %v1238
  %v1241 = vmul.f32 %v1180, %v1238
  %v1242 = vmul.f32 %v1181, %v1238
  %v1243 = vmul.f32 %v1182, %v1238
  %v1244 = vmul.f32 %v1183, %v1238
  %v1245 = vmul.f32 %v1184, %v1238
  %v1246 = vmul.f32 %v1185, %v1238
  %v1247 = vmul.f32 %v1186, %v1238
  %v1248 = vmul.f32 %v1187, %v1238
  %v1249 = vmul.f32 %v1188, %v1238
  %v1250 = vmul.f32 %v1189, %v1238
  %v1251 = vmul.f32 %v1190, %v1238
  %v1252 = vmul.f32 %v1191, %v1238
  %v1253 = vmul.f32 %v1192, %v1238
  %v1254 = vmul.f32 %v1193, %v1238
  %v1255 = vlaneseq
  %v1256 = vshrl.u32 %v1255, 7
  %v1257 = vsub.s32 3, %v1256
  %v1258 = vrot.slane %v20, %v1257
  %v1259 = vadd.f32 %v1239, %v1258
  %v1260 = vadd.f32 %v1240, %v1258
  %v1261 = vadd.f32 %v1241, %v1258
  %v1262 = vadd.f32 %v1242, %v1258
  %v1263 = vadd.f32 %v1243, %v1258
  %v1264 = vadd.f32 %v1244, %v1258
  %v1265 = vadd.f32 %v1245, %v1258
  %v1266 = vadd.f32 %v1246, %v1258
  %v1267 = vadd.f32 %v1247, %v1258
  %v1268 = vadd.f32 %v1248, %v1258
  %v1269 = vadd.f32 %v1249, %v1258
  %v1270 = vadd.f32 %v1250, %v1258
  %v1271 = vadd.f32 %v1251, %v1258
  %v1272 = vadd.f32 %v1252, %v1258
  %v1273 = vadd.f32 %v1253, %v1258
  %v1274 = vadd.f32 %v1254, %v1258
  %v1275 = vmax.f32 %v1259, 0.0
  %v1276 = vmax.f32 %v1260, 0.0
  %v1277 = vmax.f32 %v1261, 0.0
  %v1278 = vmax.f32 %v1262, 0.0
  %v1279 = vmax.f32 %v1263, 0.0
  %v1280 = vmax.f32 %v1264, 0.0
  %v1281 = vmax.f32 %v1265, 0.0
  %v1282 = vmax.f32 %v1266, 0.0
  %v1283 = vmax.f32 %v1267, 0.0
  %v1284 = vmax.f32 %v1268, 0.0
  %v1285 = vmax.f32 %v1269, 0.0
  %v1286 = vmax.f32 %v1270, 0.0
  %v1287 = vmax.f32 %v1271, 0.0
  %v1288 = vmax.f32 %v1272, 0.0
  %v1289 = vmax.f32 %v1273, 0.0
  %v1290 = vmax.f32 %v1274, 0.0
  %v1291 = vld [vmem:[%s3] sm:$0xff]
  %v1292 = vld [vmem:[%s3 + $0x8] sm:$0xff]
  %v1293 = vld [vmem:[%s3 + $0x10] sm:$0xff]
  %v1294 = vld [vmem:[%s3 + $0x18] sm:$0xff]
  %v1295 = vld [vmem:[%s3 + $0x20] sm:$0xff]
  %v1296 = vld [vmem:[%s3 + $0x28] sm:$0xff]
  %v1297 = vld [vmem:[%s3 + $0x30] sm:$0xff]
  %v1298 = vld [vmem:[%s3 + $0x38] sm:$0xff]
  %v1299 = vld [vmem:[%s3 + $0x40] sm:$0xff]
  %v1300 = vld [vmem:[%s3 + $0x48] sm:$0xff]
  %v1301 = vld [vmem:[%s3 + $0x50] sm:$0xff]
  %v1302 = vld [vmem:[%s3 + $0x58] sm:$0xff]
  %v1303 = vld [vmem:[%s3 + $0x60] sm:$0xff]
  %v1304 = vld [vmem:[%s3 + $0x68] sm:$0xff]
  %v1305 = vld [vmem:[%s3 + $0x70] sm:$0xff]
  %v1306 = vld [vmem:[%s3 + $0x78] sm:$0xff]
  %1307 = vmatprep.subr.mxu0 0.0
  %1308 = vmatpush1.msra.mxu0 %v1291
  %1309 = vmatprep.subr.mxu0 0.0
  %1310 = vmatpush1.msra.mxu0 %v1292
  %1311 = vmatprep.subr.mxu0 0.0
  %1312 = vmatpush1.msra.mxu0 %v1293
  %1313 = vmatprep.subr.mxu0 0.0
  %1314 = vmatpush1.msra.mxu0 %v1294
  %1315 = vmatprep.subr.mxu0 0.0
  %1316 = vmatpush1.msra.mxu0 %v1295
  %1317 = vmatprep.subr.mxu0 0.0
  %1318 = vmatpush1.msra.mxu0 %v1296
  %1319 = vmatprep.subr.mxu0 0.0
  %1320 = vmatpush1.msra.mxu0 %v1297
  %1321 = vmatprep.subr.mxu0 0.0
  %1322 = vmatpush1.msra.mxu0 %v1298
  %1323 = vmatprep.subr.mxu0 0.0
  %1324 = vmatpush1.msra.mxu0 %v1299
  %1325 = vmatprep.subr.mxu0 0.0
  %1326 = vmatpush1.msra.mxu0 %v1300
  %1327 = vmatprep.subr.mxu0 0.0
  %1328 = vmatpush1.msra.mxu0 %v1301
  %1329 = vmatprep.subr.mxu0 0.0
  %1330 = vmatpush1.msra.mxu0 %v1302
  %1331 = vmatprep.subr.mxu0 0.0
  %1332 = vmatpush1.msra.mxu0 %v1303
  %1333 = vmatprep.subr.mxu0 0.0
  %1334 = vmatpush1.msra.mxu0 %v1304
  %1335 = vmatprep.subr.mxu0 0.0
  %1336 = vmatpush1.msra.mxu0 %v1305
  %1337 = vmatprep.subr.mxu0 0.0
  %1338 = vmatpush1.msra.mxu0 %v1306
  %1339 = vmatprep.subr.mxu0 0.0
  %1340 = vmatpush1.msra.mxu0 0.0
  %1341 = vmatprep.subr.mxu0 0.0
  %1342 = vmatpush1.msra.mxu0 0.0
  %1343 = vmatprep.subr.mxu0 0.0
  %1344 = vmatpush1.msra.mxu0 0.0
  %1345 = vmatprep.subr.mxu0 0.0
  %1346 = vmatpush1.msra.mxu0 0.0
  %1347 = vmatprep.subr.mxu0 0.0
  %1348 = vmatpush1.msra.mxu0 0.0
  %1349 = vmatprep.subr.mxu0 0.0
  %1350 = vmatpush1.msra.mxu0 0.0
  %1351 = vmatprep.subr.mxu0 0.0
  %1352 = vmatpush1.msra.mxu0 0.0
  %1353 = vmatprep.subr.mxu0 0.0
  %1354 = vmatpush1.msra.mxu0 0.0
  %1355 = vmatprep.subr.mxu0 0.0
  %1356 = vmatpush1.msra.mxu0 0.0
  %1357 = vmatprep.subr.mxu0 0.0
  %1358 = vmatpush1.msra.mxu0 0.0
  %1359 = vmatprep.subr.mxu0 0.0
  %1360 = vmatpush1.msra.mxu0 0.0
  %1361 = vmatprep.subr.mxu0 0.0
  %1362 = vmatpush1.msra.mxu0 0.0
  %1363 = vmatprep.subr.mxu0 0.0
  %1364 = vmatpush1.msra.mxu0 0.0
  %1365 = vmatprep.subr.mxu0 0.0
  %1366 = vmatpush1.msra.mxu0 0.0
  %1367 = vmatprep.subr.mxu0 0.0
  %1368 = vmatpush1.msra.mxu0 0.0
  %1369 = vmatprep.subr.mxu0 0.0
  %1370 = vmatpush1.msra.mxu0 0.0
  %1371 = vmatprep.mubr.f32.mxu0 0.0
  %1372 = vmatmul.mubr.f32.gmra.mrb[0].mxu0 %v1275
  %v1373 = vpop.f32.mrb[0].mxu0
  %v1374 = vadd.f32 0.0, %v1373
  %v1375 = vpop.f32.mrb[0].mxu0
  %1376 = vmatprep.mubr.f32.mxu0 0.0
  %1377 = vmatmul.mubr.f32.gmra.mrb[0].mxu0 %v1276
  %v1378 = vpop.f32.mrb[0].mxu0
  %v1379 = vadd.f32 0.0, %v1378
  %v1380 = vpop.f32.mrb[0].mxu0
  %1381 = vmatprep.mubr.f32.mxu0 0.0
  %1382 = vmatmul.mubr.f32.gmra.mrb[0].mxu0 %v1277
  %v1383 = vpop.f32.mrb[0].mxu0
  %v1384 = vadd.f32 0.0, %v1383
  %v1385 = vpop.f32.mrb[0].mxu0
  %1386 = vmatprep.mubr.f32.mxu0 0.0
  %1387 = vmatmul.mubr.f32.gmra.mrb[0].mxu0 %v1278
  %v1388 = vpop.f32.mrb[0].mxu0
  %v1389 = vadd.f32 0.0, %v1388
  %v1390 = vpop.f32.mrb[0].mxu0
  %1391 = vmatprep.mubr.f32.mxu0 0.0
  %1392 = vmatmul.mubr.f32.gmra.mrb[0].mxu0 %v1279
  %v1393 = vpop.f32.mrb[0].mxu0
  %v1394 = vadd.f32 0.0, %v1393
  %v1395 = vpop.f32.mrb[0].mxu0
  %1396 = vmatprep.mubr.f32.mxu0 0.0
  %1397 = vmatmul.mubr.f32.gmra.mrb[0].mxu0 %v1280
  %v1398 = vpop.f32.mrb[0].mxu0
  %v1399 = vadd.f32 0.0, %v1398
  %v1400 = vpop.f32.mrb[0].mxu0
  %1401 = vmatprep.mubr.f32.mxu0 0.0
  %1402 = vmatmul.mubr.f32.gmra.mrb[0].mxu0 %v1281
  %v1403 = vpop.f32.mrb[0].mxu0
  %v1404 = vadd.f32 0.0, %v1403
  %v1405 = vpop.f32.mrb[0].mxu0
  %1406 = vmatprep.mubr.f32.mxu0 0.0
  %1407 = vmatmul.mubr.f32.gmra.mrb[0].mxu0 %v1282
  %v1408 = vpop.f32.mrb[0].mxu0
  %v1409 = vadd.f32 0.0, %v1408
  %v1410 = vpop.f32.mrb[0].mxu0
  %1411 = vmatprep.mubr.f32.mxu0 0.0
  %1412 = vmatmul.mubr.f32.gmra.mrb[0].mxu0 %v1283
  %v1413 = vpop.f32.mrb[0].mxu0
  %v1414 = vadd.f32 0.0, %v1413
  %v1415 = vpop.f32.mrb[0].mxu0
  %1416 = vmatprep.mubr.f32.mxu0 0.0
  %1417 = vmatmul.mubr.f32.gmra.mrb[0].mxu0 %v1284
  %v1418 = vpop.f32.mrb[0].mxu0
  %v1419 = vadd.f32 0.0, %v1418
  %v1420 = vpop.f32.mrb[0].mxu0
  %1421 = vmatprep.mubr.f32.mxu0 0.0
  %1422 = vmatmul.mubr.f32.gmra.mrb[0].mxu0 %v1285
  %v1423 = vpop.f32.mrb[0].mxu0
  %v1424 = vadd.f32 0.0, %v1423
  %v1425 = vpop.f32.mrb[0].mxu0
  %1426 = vmatprep.mubr.f32.mxu0 0.0
  %1427 = vmatmul.mubr.f32.gmra.mrb[0].mxu0 %v1286
  %v1428 = vpop.f32.mrb[0].mxu0
  %v1429 = vadd.f32 0.0, %v1428
  %v1430 = vpop.f32.mrb[0].mxu0
  %1431 = vmatprep.mubr.f32.mxu0 0.0
  %1432 = vmatmul.mubr.f32.gmra.mrb[0].mxu0 %v1287
  %v1433 = vpop.f32.mrb[0].mxu0
  %v1434 = vadd.f32 0.0, %v1433
  %v1435 = vpop.f32.mrb[0].mxu0
  %1436 = vmatprep.mubr.f32.mxu0 0.0
  %1437 = vmatmul.mubr.f32.gmra.mrb[0].mxu0 %v1288
  %v1438 = vpop.f32.mrb[0].mxu0
  %v1439 = vadd.f32 0.0, %v1438
  %v1440 = vpop.f32.mrb[0].mxu0
  %1441 = vmatprep.mubr.f32.mxu0 0.0
  %1442 = vmatmul.mubr.f32.gmra.mrb[0].mxu0 %v1289
  %v1443 = vpop.f32.mrb[0].mxu0
  %v1444 = vadd.f32 0.0, %v1443
  %v1445 = vpop.f32.mrb[0].mxu0
  %1446 = vmatprep.mubr.f32.mxu0 0.0
  %1447 = vmatmul.mubr.f32.gmra.mrb[0].mxu0 %v1290
  %v1448 = vpop.f32.mrb[0].mxu0
  %v1449 = vadd.f32 0.0, %v1448
  %v1450 = vpop.f32.mrb[0].mxu0
  %1451 = vdwg.mxu0
  %v1452 = vadd.f32 %v1374, %v1379
  %v1453 = vadd.f32 %v1452, %v1384
  %v1454 = vadd.f32 %v1453, %v1389
  %v1455 = vadd.f32 %v1454, %v1394
  %v1456 = vadd.f32 %v1455, %v1399
  %v1457 = vadd.f32 %v1456, %v1404
  %v1458 = vadd.f32 %v1457, %v1409
  %v1459 = vadd.f32 %v1458, %v1414
  %v1460 = vadd.f32 %v1459, %v1419
  %v1461 = vadd.f32 %v1460, %v1424
  %v1462 = vadd.f32 %v1461, %v1429
  %v1463 = vadd.f32 %v1462, %v1434
  %v1464 = vadd.f32 %v1463, %v1439
  %v1465 = vadd.f32 %v1464, %v1444
  %v1466 = vadd.f32 %v1465, %v1449
  %v1467 = vrot.slane %v1466, 4
  %v1468 = vadd.f32 %v1466, %v1467
  %v1469 = vrot.slane %v1468, 2
  %v1470 = vadd.f32 %v1468, %v1469
  %v1471 = vrot.slane %v1470, 1
  %v1472 = vadd.f32 %v1470, %v1471
  %v1473 = vmul.f32 %v1472, 0.0078125
  %v1474 = vsub.f32 %v1374, %v1473
  %v1475 = vsub.f32 %v1379, %v1473
  %v1476 = vsub.f32 %v1384, %v1473
  %v1477 = vsub.f32 %v1389, %v1473
  %v1478 = vsub.f32 %v1394, %v1473
  %v1479 = vsub.f32 %v1399, %v1473
  %v1480 = vsub.f32 %v1404, %v1473
  %v1481 = vsub.f32 %v1409, %v1473
  %v1482 = vsub.f32 %v1414, %v1473
  %v1483 = vsub.f32 %v1419, %v1473
  %v1484 = vsub.f32 %v1424, %v1473
  %v1485 = vsub.f32 %v1429, %v1473
  %v1486 = vsub.f32 %v1434, %v1473
  %v1487 = vsub.f32 %v1439, %v1473
  %v1488 = vsub.f32 %v1444, %v1473
  %v1489 = vsub.f32 %v1449, %v1473
  %v1490 = vmul.f32 %v1474, %v1474
  %v1491 = vmul.f32 %v1475, %v1475
  %v1492 = vmul.f32 %v1476, %v1476
  %v1493 = vmul.f32 %v1477, %v1477
  %v1494 = vmul.f32 %v1478, %v1478
  %v1495 = vmul.f32 %v1479, %v1479
  %v1496 = vmul.f32 %v1480, %v1480
  %v1497 = vmul.f32 %v1481, %v1481
  %v1498 = vmul.f32 %v1482, %v1482
  %v1499 = vmul.f32 %v1483, %v1483
  %v1500 = vmul.f32 %v1484, %v1484
  %v1501 = vmul.f32 %v1485, %v1485
  %v1502 = vmul.f32 %v1486, %v1486
  %v1503 = vmul.f32 %v1487, %v1487
  %v1504 = vmul.f32 %v1488, %v1488
  %v1505 = vmul.f32 %v1489, %v1489
  %v1506 = vadd.f32 %v1490, %v1491
  %v1507 = vadd.f32 %v1506, %v1492
  %v1508 = vadd.f32 %v1507, %v1493
  %v1509 = vadd.f32 %v1508, %v1494
  %v1510 = vadd.f32 %v1509, %v1495
  %v1511 = vadd.f32 %v1510, %v1496
  %v1512 = vadd.f32 %v1511, %v1497
  %v1513 = vadd.f32 %v1512, %v1498
  %v1514 = vadd.f32 %v1513, %v1499
  %v1515 = vadd.f32 %v1514, %v1500
  %v1516 = vadd.f32 %v1515, %v1501
  %v1517 = vadd.f32 %v1516, %v1502
  %v1518 = vadd.f32 %v1517, %v1503
  %v1519 = vadd.f32 %v1518, %v1504
  %v1520 = vadd.f32 %v1519, %v1505
  %v1521 = vrot.slane %v1520, 4
  %v1522 = vadd.f32 %v1520, %v1521
  %v1523 = vrot.slane %v1522, 2
  %v1524 = vadd.f32 %v1522, %v1523
  %v1525 = vrot.slane %v1524, 1
  %v1526 = vadd.f32 %v1524, %v1525
  %v1527 = vmul.f32 %v1526, 0.0078125
  %v1528 = vadd.f32 %v1527, 1e-05
  %v1529 = vrsqrt.pop %v1528
  %v1530 = vmul.f32 %v1529, %v20
  %v1531 = vlaneseq
  %v1532 = vshrl.u32 %v1531, 7
  %v1533 = vsub.s32 4, %v1532
  %v1534 = vrot.slane %v1530, %v1533
  %v1535 = vmul.f32 %v1474, %v1534
  %v1536 = vmul.f32 %v1475, %v1534
  %v1537 = vmul.f32 %v1476, %v1534
  %v1538 = vmul.f32 %v1477, %v1534
  %v1539 = vmul.f32 %v1478, %v1534
  %v1540 = vmul.f32 %v1479, %v1534
  %v1541 = vmul.f32 %v1480, %v1534
  %v1542 = vmul.f32 %v1481, %v1534
  %v1543 = vmul.f32 %v1482, %v1534
  %v1544 = vmul.f32 %v1483, %v1534
  %v1545 = vmul.f32 %v1484, %v1534
  %v1546 = vmul.f32 %v1485, %v1534
  %v1547 = vmul.f32 %v1486, %v1534
  %v1548 = vmul.f32 %v1487, %v1534
  %v1549 = vmul.f32 %v1488, %v1534
  %v1550 = vmul.f32 %v1489, %v1534
  %v1551 = vlaneseq
  %v1552 = vshrl.u32 %v1551, 7
  %v1553 = vsub.s32 5, %v1552
  %v1554 = vrot.slane %v20, %v1553
  %v1555 = vadd.f32 %v1535, %v1554
  %v1556 = vadd.f32 %v1536, %v1554
  %v1557 = vadd.f32 %v1537, %v1554
  %v1558 = vadd.f32 %v1538, %v1554
  %v1559 = vadd.f32 %v1539, %v1554
  %v1560 = vadd.f32 %v1540, %v1554
  %v1561 = vadd.f32 %v1541, %v1554
  %v1562 = vadd.f32 %v1542, %v1554
  %v1563 = vadd.f32 %v1543, %v1554
  %v1564 = vadd.f32 %v1544, %v1554
  %v1565 = vadd.f32 %v1545, %v1554
  %v1566 = vadd.f32 %v1546, %v1554
  %v1567 = vadd.f32 %v1547, %v1554
  %v1568 = vadd.f32 %v1548, %v1554
  %v1569 = vadd.f32 %v1549, %v1554
  %v1570 = vadd.f32 %v1550, %v1554
  %1571 = vst [vmem:[%s5] sm:$0xff] %v1555
  %1572 = vst [vmem:[%s5 + $0x8] sm:$0xff] %v1556
  %1573 = vst [vmem:[%s5 + $0x10] sm:$0xff] %v1557
  %1574 = vst [vmem:[%s5 + $0x18] sm:$0xff] %v1558
  %1575 = vst [vmem:[%s5 + $0x20] sm:$0xff] %v1559
  %1576 = vst [vmem:[%s5 + $0x28] sm:$0xff] %v1560
  %1577 = vst [vmem:[%s5 + $0x30] sm:$0xff] %v1561
  %1578 = vst [vmem:[%s5 + $0x38] sm:$0xff] %v1562
  %1579 = vst [vmem:[%s5 + $0x40] sm:$0xff] %v1563
  %1580 = vst [vmem:[%s5 + $0x48] sm:$0xff] %v1564
  %1581 = vst [vmem:[%s5 + $0x50] sm:$0xff] %v1565
  %1582 = vst [vmem:[%s5 + $0x58] sm:$0xff] %v1566
  %1583 = vst [vmem:[%s5 + $0x60] sm:$0xff] %v1567
  %1584 = vst [vmem:[%s5 + $0x68] sm:$0xff] %v1568
  %1585 = vst [vmem:[%s5 + $0x70] sm:$0xff] %v1569
  %1586 = vst [vmem:[%s5 + $0x78] sm:$0xff] %v1570
  // Predicated region
  $region22: #{forward.1} parent=0 // pred_check
    _
  $region23: #{forward.1} parent=0 // pred_check_branch
    %1588 = sbr.rel (0) target = $region25
  $region24: #{forward.1} parent=0 // pred_region
    _
  $region25: #{forward.1} parent=0 // pred_fallthru
    _
  // Predicated region
  $region26: #{forward.1} parent=0 // pred_check
    _
  $region27: #{forward.1} parent=0 // pred_check_branch
    %1590 = sbr.rel (0) target = $region29
  $region28: #{forward.1} parent=0 // pred_region
    _
  $region29: #{forward.1} parent=0 // pred_fallthru
    _

</llo_original>
